<compile_context>
chip_gen: v7x
topology: tpu7x:2x2x1
jax: 0.10.0
libtpu: 0.0.40
codegen_flags: <defaults>
</compile_context>

<pallas_src>
import math

import jax
import jax.numpy as jnp
from jax import lax
from jax.experimental import pallas as pl
from jax.experimental.pallas import tpu as pltpu


def _hybrid_attention_kernel(x_tile_ref,   # (C, tn)   current row tile of x
                             x_full_ref,   # (C, N)    full x (resident per batch)
                             w_fha_ref,    # (C, 2*C8+1) packed [wf | wh | wa]
                             b_fh_ref,     # (2*C8, 1)   packed [bf ; bh]
                             w_ga_ref,     # (C, C8+1)   packed [wg | wa]
                             bg_ref,       # (C8, 1)
                             wv_ref,       # (C8, C)
                             bv_ref,       # (C, 1)
                             scal_ref,     # SMEM (1, 2): [ba, gamma]
                             o_ref,        # (C, N)
                             g_all,        # VMEM scratch (C8, N) f32
                             acc):         # VMEM scratch (C8, N) f32
    n = pl.program_id(1)
    n_last = pl.num_programs(1) - 1
    C8 = acc.shape[0]
    ba = scal_ref[0, 0]
    gamma = scal_ref[0, 1]

    # ---- once per batch: g over ALL spatial positions; reset accumulator ----
    @pl.when(n == 0)
    def _():
        xf = x_full_ref[...]                                            # (C, N)
        pg = lax.dot_general(w_ga_ref[...], xf, (((0,), (0,)), ((), ())),
                             preferred_element_type=jnp.float32)        # (C8+1, N)
        act_all = pg[C8:C8 + 1, :] + ba                                 # (1, N)
        g_all[...] = act_all * pg[:C8, :] + bg_ref[...]                 # (C8, N)
        acc[...] = jnp.zeros_like(acc)

    # ---- per row tile: spatial-attention scale + f/h projections (fused) ----
    xt = x_tile_ref[...]                                                # (C, tn)
    proj = lax.dot_general(w_fha_ref[...], xt, (((0,), (0,)), ((), ())),
                           preferred_element_type=jnp.float32)          # (2*C8+1, tn)
    act = proj[2 * C8:2 * C8 + 1, :] + ba                               # (1, tn)
    fh = act * proj[:2 * C8, :] + b_fh_ref[...]                         # (2*C8, tn)
    f = fh[:C8, :]                                                      # (C8, tn)
    h = fh[C8:, :]                                                      # (C8, tn)

    # ---- scores of this row tile against ALL columns; exact softmax --------
    s = lax.dot_general(f, g_all[...], (((0,), (0,)), ((), ())),
                        preferred_element_type=jnp.float32)             # (tn, N)
    s = s - jnp.max(s, axis=-1, keepdims=True)
    p = jnp.exp(s)
    l = jnp.sum(p, axis=-1, keepdims=True)                              # (tn, 1)
    # fold the softmax denominator into h (C8*tn mults, not tn*N divides)
    h_scaled = h * jnp.transpose(1.0 / l)                               # (C8, tn)

    # contribution of this row tile to sa[:, m] = sum_n attn[n, m] * h[:, n]
    acc[...] += lax.dot_general(h_scaled, p, (((1,), (0,)), ((), ())),
                                preferred_element_type=jnp.float32)     # (C8, N)

    # ---- last row tile: output 1x1 conv + gamma scale -----------------------
    @pl.when(n == n_last)
    def _():
        vo = lax.dot_general(wv_ref[...], acc[...], (((0,), (0,)), ((), ())),
                             preferred_element_type=jnp.float32)        # (C, N)
        o_ref[...] = (gamma * (vo + bv_ref[...])).astype(o_ref.dtype)


def _pick_row_tile(N):
    """Row tile (attention rows per grid step).  Must divide N and be a
    multiple of 128 (Mosaic lane constraint) unless it is the whole axis."""
    if N <= 1024:
        return N
    for t in (512, 256, 128):       # 256-ish is the sweet spot on v7x's 64 MiB
        if N % t == 0:
            return t
    return N


def hybrid_attention(x_nchw, params):
    B, C, H, W = x_nchw.shape
    N = H * W
    C8 = C // 8
    x = x_nchw.reshape(B, C, N)     # free reshape, no transposes

    tn = _pick_row_tile(N)
    grid = (B, N // tn)

    # weight packing (tiny, done once per call in plain JAX)
    w_fha = jnp.concatenate([params["wf"], params["wh"], params["wa"]], axis=1)  # (C, 2*C8+1)
    b_fh = jnp.concatenate([params["bf"], params["bh"]], axis=0)                 # (2*C8, 1)
    w_ga = jnp.concatenate([params["wg"], params["wa"]], axis=1)                 # (C, C8+1)
    scalars = jnp.stack([params["ba"].reshape(()),
                         params["gamma"].reshape(())]).reshape(1, 2).astype(jnp.float32)

    full = lambda shape: pl.BlockSpec(shape, lambda b, n: tuple(0 for _ in shape))

    out = pl.pallas_call(
        _hybrid_attention_kernel,
        out_shape=jax.ShapeDtypeStruct((B, C, N), x.dtype),
        grid_spec=pltpu.PrefetchScalarGridSpec(
            num_scalar_prefetch=0,
            grid=grid,
            in_specs=[
                pl.BlockSpec((None, C, tn), lambda b, n: (b, 0, n)),   # x row tile
                pl.BlockSpec((None, C, N), lambda b, n: (b, 0, 0)),    # x full (per batch)
                full((C, 2 * C8 + 1)),                                 # [wf | wh | wa]
                full((2 * C8, 1)),                                     # [bf ; bh]
                full((C, C8 + 1)),                                     # [wg | wa]
                full((C8, 1)),                                         # bg
                full((C8, C)),                                         # wv
                full((C, 1)),                                          # bv
                pl.BlockSpec(memory_space=pltpu.MemorySpace.SMEM),     # [ba, gamma]
            ],
            out_specs=pl.BlockSpec((None, C, N), lambda b, n: (b, 0, 0)),
            scratch_shapes=[pltpu.VMEM((C8, N), jnp.float32),          # g (all positions)
                            pltpu.VMEM((C8, N), jnp.float32)],         # sa accumulator
        ),
        compiler_params=pltpu.CompilerParams(
            dimension_semantics=("parallel", "arbitrary"),
            vmem_limit_bytes=64 * 1024 * 1024,
        ),
    )(x, x, w_fha, b_fh, w_ga, params["bg"], params["wv"], params["bv"], scalars)

    return out.reshape(B, C, H, W)


def init_params(key, C):
    """Deterministic parameters matching the PyTorch module.

    1x1 conv weights stored as (Cin, Cout) (torch weight[:, :, 0, 0].T).
    f/g/h: xavier_uniform weights, zero bias (init_conv).
    spatial conv + v: PyTorch default conv init (uniform, bound 1/sqrt(fan_in)).
    gamma: zeros, exactly as nn.Parameter(torch.zeros(1)).
    """
    C8 = C // 8
    ks = jax.random.split(key, 6)

    def xavier(k, fan_in, fan_out):
        bound = math.sqrt(6.0 / (fan_in + fan_out))
        return jax.random.uniform(k, (fan_in, fan_out), jnp.float32, -bound, bound)

    def default_conv(k, fan_in, fan_out):
        kw, kb = jax.random.split(k)
        bound = 1.0 / math.sqrt(fan_in)
        w = jax.random.uniform(kw, (fan_in, fan_out), jnp.float32, -bound, bound)
        b = jax.random.uniform(kb, (fan_out, 1), jnp.float32, -bound, bound)
        return w, b

    wa, ba_col = default_conv(ks[0], C, 1)          # Spatial_Attention conv (default init)
    ba = ba_col[:, 0]                               # (1,)
    wf = xavier(ks[1], C, C8); bf = jnp.zeros((C8, 1), jnp.float32)
    wg = xavier(ks[2], C, C8); bg = jnp.zeros((C8, 1), jnp.float32)
    wh = xavier(ks[3], C, C8); bh = jnp.zeros((C8, 1), jnp.float32)
    wv, bv = default_conv(ks[4], C8, C)             # self.v is NOT xavier-init'd
    gamma = jnp.zeros((1,), jnp.float32)            # torch.zeros(1)
    return dict(wa=wa, ba=ba, wf=wf, bf=bf, wg=wg, bg=bg, wh=wh, bh=bh,
                wv=wv, bv=bv, gamma=gamma)


def reference(x_nchw, p):
    """Pure-JAX reference of the PyTorch forward (for validation)."""
    B, C, H, W = x_nchw.shape
    N = H * W
    x = x_nchw.reshape(B, C, N)                                     # (B, C, N)
    act = jnp.einsum("bcn,co->bon", x, p["wa"]) + p["ba"][0]        # (B, 1, N)
    xs = x * act
    f = jnp.einsum("bcn,ck->bkn", xs, p["wf"]) + p["bf"]
    g = jnp.einsum("bcn,ck->bkn", xs, p["wg"]) + p["bg"]
    h = jnp.einsum("bcn,ck->bkn", xs, p["wh"]) + p["bh"]
    s = jnp.einsum("bki,bkj->bij", f, g)                            # (B, N, N)
    attn = jax.nn.softmax(s, axis=-1)
    sa = jnp.einsum("bkn,bnm->bkm", h, attn)                        # (B, C8, N)
    vo = jnp.einsum("bkn,kc->bcn", sa, p["wv"]) + p["bv"]
    out = p["gamma"][0] * vo
    return out.reshape(B, C, H, W)


if __name__ == "__main__":
    key = jax.random.PRNGKey(0)
    kx, kp = jax.random.split(key)

    B, C, H, W = 2, 16, 8, 8      # C must be a multiple of 8 (C//8 bottleneck)
    x = jax.random.normal(kx, (B, C, H, W), jnp.float32)
    params = init_params(kp, C)

    # Faithful run: gamma == 0 exactly as in __init__ (output is zero by construction).
    out = hybrid_attention(x, params)
    jax.block_until_ready(out)
    assert out.shape == (B, C, H, W)

    # Validation run with nonzero gamma so the whole pipeline is actually checked.
    params_nz = dict(params, gamma=jnp.full((1,), 0.7, jnp.float32))
    out_nz = hybrid_attention(x, params_nz)
    ref_nz = reference(x, params_nz)
    jax.block_until_ready(out_nz)
    assert jnp.allclose(out_nz, ref_nz, atol=1e-4, rtol=1e-4), \
        float(jnp.max(jnp.abs(out_nz - ref_nz)))

    print("KERNEL_OK")
</pallas_src>

<mosaic_0001>
module attributes {stable_mosaic.version = 11 : i64} {
  func.func @_hybrid_attention_kernel(%arg0: i32, %arg1: i32, %arg2: memref<1x16x64xf32, #tpu.memory_space<vmem>>, %arg3: memref<1x16x64xf32, #tpu.memory_space<vmem>>, %arg4: memref<16x5xf32, #tpu.memory_space<vmem>>, %arg5: memref<4x1xf32, #tpu.memory_space<vmem>>, %arg6: memref<16x3xf32, #tpu.memory_space<vmem>>, %arg7: memref<2x1xf32, #tpu.memory_space<vmem>>, %arg8: memref<2x16xf32, #tpu.memory_space<vmem>>, %arg9: memref<16x1xf32, #tpu.memory_space<vmem>>, %arg10: memref<1x2xf32, #tpu.memory_space<smem>>, %arg11: memref<1x16x64xf32, #tpu.memory_space<vmem>>, %arg12: memref<2x64xf32, #tpu.memory_space<vmem>>, %arg13: memref<2x64xf32, #tpu.memory_space<vmem>>) attributes {dimension_semantics = [#tpu.dimension_semantics<parallel>, #tpu.dimension_semantics<arbitrary>], iteration_bounds = array<i64: 2, 1>, scalar_prefetch = 0 : i64, scratch_operands = 2 : i64, tpu.core_type = #tpu.core_type<tc>, window_params = [{transform_indices = @transform_0, window_bounds = array<i64: 1, 16, 64>}, {transform_indices = @transform_1, window_bounds = array<i64: 1, 16, 64>}, {pipeline_mode = #tpu.pipeline_mode<synchronous>, transform_indices = @transform_2, window_bounds = array<i64: 16, 5>}, {pipeline_mode = #tpu.pipeline_mode<synchronous>, transform_indices = @transform_3, window_bounds = array<i64: 4, 1>}, {pipeline_mode = #tpu.pipeline_mode<synchronous>, transform_indices = @transform_4, window_bounds = array<i64: 16, 3>}, {pipeline_mode = #tpu.pipeline_mode<synchronous>, transform_indices = @transform_5, window_bounds = array<i64: 2, 1>}, {pipeline_mode = #tpu.pipeline_mode<synchronous>, transform_indices = @transform_6, window_bounds = array<i64: 2, 16>}, {pipeline_mode = #tpu.pipeline_mode<synchronous>, transform_indices = @transform_7, window_bounds = array<i64: 16, 1>}, {transform_indices = @transform_8, window_bounds = array<i64: 1, 2>}, {transform_indices = @transform_9, window_bounds = array<i64: 1, 16, 64>}]} {
    %c0 = arith.constant 0 : index
    %c0_0 = arith.constant 0 : index
    %0 = memref.load %arg10[%c0, %c0_0] : memref<1x2xf32, #tpu.memory_space<smem>>
    %c0_1 = arith.constant 0 : index
    %c1 = arith.constant 1 : index
    %1 = memref.load %arg10[%c0_1, %c1] : memref<1x2xf32, #tpu.memory_space<smem>>
    %c0_i32 = arith.constant 0 : i32
    %2 = arith.cmpi eq, %arg1, %c0_i32 : i32
    %3 = arith.extui %2 : i1 to i32
    %c0_i32_2 = arith.constant 0 : i32
    %4 = arith.cmpi ne, %3, %c0_i32_2 : i32
    scf.if %4 {
      %c0_23 = arith.constant 0 : index
      %c0_24 = arith.constant 0 : index
      %c0_25 = arith.constant 0 : index
      %41 = vector.load %arg3[%c0_23, %c0_24, %c0_25] : memref<1x16x64xf32, #tpu.memory_space<vmem>>, vector<1x16x64xf32>
      %42 = vector.shape_cast %41 : vector<1x16x64xf32> to vector<16x64xf32>
      %c0_26 = arith.constant 0 : index
      %c0_27 = arith.constant 0 : index
      %43 = vector.load %arg6[%c0_26, %c0_27] : memref<16x3xf32, #tpu.memory_space<vmem>>, vector<16x3xf32>
      %cst_28 = arith.constant dense<0.000000e+00> : vector<3x64xf32>
      %44 = tpu.matmul %43, %42, %cst_28 {dimension_numbers = #tpu.dot_dimension_numbers<[0], [0], [1], [1], [0, 1, 1, 1], [], []>} : vector<16x3xf32>, vector<16x64xf32>, vector<3x64xf32> -> vector<3x64xf32>
      %45 = vector.extract_strided_slice %44 {offsets = [2, 0], sizes = [1, 64], strides = [1, 1]} : vector<3x64xf32> to vector<1x64xf32>
      %46 = vector.broadcast %0 : f32 to vector<1x64xf32>
      %47 = arith.addf %45, %46 : vector<1x64xf32>
      %48 = vector.extract_strided_slice %44 {offsets = [0, 0], sizes = [2, 64], strides = [1, 1]} : vector<3x64xf32> to vector<2x64xf32>
      %49 = vector.broadcast %47 : vector<1x64xf32> to vector<2x64xf32>
      %50 = arith.mulf %49, %48 : vector<2x64xf32>
      %c0_29 = arith.constant 0 : index
      %c0_30 = arith.constant 0 : index
      %51 = vector.load %arg7[%c0_29, %c0_30] : memref<2x1xf32, #tpu.memory_space<vmem>>, vector<2x1xf32>
      %52 = vector.broadcast %51 : vector<2x1xf32> to vector<2x64xf32>
      %53 = arith.addf %50, %52 : vector<2x64xf32>
      %c0_31 = arith.constant 0 : index
      %c0_32 = arith.constant 0 : index
      %54 = vector.load %arg12[%c0_31, %c0_32] : memref<2x64xf32, #tpu.memory_space<vmem>>, vector<2x64xf32>
      tpu.vector_store %arg12[%c0_31, %c0_32], %53 {strides = array<i32>} : memref<2x64xf32, #tpu.memory_space<vmem>>, vector<2x64xf32>,
      %cst_33 = arith.constant 0.000000e+00 : f32
      %55 = vector.broadcast %cst_33 : f32 to vector<2x64xf32>
      %c0_34 = arith.constant 0 : index
      %c0_35 = arith.constant 0 : index
      %56 = vector.load %arg13[%c0_34, %c0_35] : memref<2x64xf32, #tpu.memory_space<vmem>>, vector<2x64xf32>
      tpu.vector_store %arg13[%c0_34, %c0_35], %55 {strides = array<i32>} : memref<2x64xf32, #tpu.memory_space<vmem>>, vector<2x64xf32>,
    } else {
    }
    %c0_3 = arith.constant 0 : index
    %c0_4 = arith.constant 0 : index
    %c0_5 = arith.constant 0 : index
    %5 = vector.load %arg2[%c0_3, %c0_4, %c0_5] : memref<1x16x64xf32, #tpu.memory_space<vmem>>, vector<1x16x64xf32>
    %6 = vector.shape_cast %5 : vector<1x16x64xf32> to vector<16x64xf32>
    %c0_6 = arith.constant 0 : index
    %c0_7 = arith.constant 0 : index
    %7 = vector.load %arg4[%c0_6, %c0_7] : memref<16x5xf32, #tpu.memory_space<vmem>>, vector<16x5xf32>
    %cst = arith.constant dense<0.000000e+00> : vector<5x64xf32>
    %8 = tpu.matmul %7, %6, %cst {dimension_numbers = #tpu.dot_dimension_numbers<[0], [0], [1], [1], [0, 1, 1, 1], [], []>} : vector<16x5xf32>, vector<16x64xf32>, vector<5x64xf32> -> vector<5x64xf32>
    %9 = vector.extract_strided_slice %8 {offsets = [4, 0], sizes = [1, 64], strides = [1, 1]} : vector<5x64xf32> to vector<1x64xf32>
    %10 = vector.broadcast %0 : f32 to vector<1x64xf32>
    %11 = arith.addf %9, %10 : vector<1x64xf32>
    %12 = vector.extract_strided_slice %8 {offsets = [0, 0], sizes = [4, 64], strides = [1, 1]} : vector<5x64xf32> to vector<4x64xf32>
    %13 = vector.broadcast %11 : vector<1x64xf32> to vector<4x64xf32>
    %14 = arith.mulf %13, %12 : vector<4x64xf32>
    %c0_8 = arith.constant 0 : index
    %c0_9 = arith.constant 0 : index
    %15 = vector.load %arg5[%c0_8, %c0_9] : memref<4x1xf32, #tpu.memory_space<vmem>>, vector<4x1xf32>
    %16 = vector.broadcast %15 : vector<4x1xf32> to vector<4x64xf32>
    %17 = arith.addf %14, %16 : vector<4x64xf32>
    %18 = vector.extract_strided_slice %17 {offsets = [0, 0], sizes = [2, 64], strides = [1, 1]} : vector<4x64xf32> to vector<2x64xf32>
    %19 = vector.extract_strided_slice %17 {offsets = [2, 0], sizes = [2, 64], strides = [1, 1]} : vector<4x64xf32> to vector<2x64xf32>
    %c0_10 = arith.constant 0 : index
    %c0_11 = arith.constant 0 : index
    %20 = vector.load %arg12[%c0_10, %c0_11] : memref<2x64xf32, #tpu.memory_space<vmem>>, vector<2x64xf32>
    %cst_12 = arith.constant dense<0.000000e+00> : vector<64x64xf32>
    %21 = tpu.matmul %18, %20, %cst_12 {dimension_numbers = #tpu.dot_dimension_numbers<[0], [0], [1], [1], [0, 1, 1, 1], [], []>} : vector<2x64xf32>, vector<2x64xf32>, vector<64x64xf32> -> vector<64x64xf32>
    %cst_13 = arith.constant dense<0xFF800000> : vector<64xf32>
    %22 = vector.multi_reduction <maximumf>, %21, %cst_13 [1] : vector<64x64xf32> to vector<64xf32>
    %23 = vector.shape_cast %22 : vector<64xf32> to vector<64x1xf32>
    %24 = vector.broadcast %23 : vector<64x1xf32> to vector<64x64xf32>
    %25 = arith.subf %21, %24 : vector<64x64xf32>
    %26 = math.exp %25 : vector<64x64xf32>
    %cst_14 = arith.constant dense<0.000000e+00> : vector<64xf32>
    %27 = vector.multi_reduction <add>, %26, %cst_14 [1] : vector<64x64xf32> to vector<64xf32>
    %28 = vector.shape_cast %27 : vector<64xf32> to vector<64x1xf32>
    %cst_15 = arith.constant 1.000000e+00 : f32
    %29 = vector.broadcast %cst_15 : f32 to vector<64x1xf32>
    %30 = arith.divf %29, %28 : vector<64x1xf32>
    %31 = tpu.transpose %30, [1, 0] : vector<64x1xf32> -> vector<1x64xf32>
    %32 = vector.broadcast %31 : vector<1x64xf32> to vector<2x64xf32>
    %33 = arith.mulf %19, %32 : vector<2x64xf32>
    %c0_16 = arith.constant 0 : index
    %c0_17 = arith.constant 0 : index
    %34 = vector.load %arg13[%c0_16, %c0_17] : memref<2x64xf32, #tpu.memory_space<vmem>>, vector<2x64xf32>
    %cst_18 = arith.constant dense<0.000000e+00> : vector<2x64xf32>
    %35 = tpu.matmul %33, %26, %cst_18 {dimension_numbers = #tpu.dot_dimension_numbers<[1], [0], [0], [1], [0, 0, 1, 1], [], []>} : vector<2x64xf32>, vector<64x64xf32>, vector<2x64xf32> -> vector<2x64xf32>
    %36 = arith.addf %34, %35 : vector<2x64xf32>
    %c0_19 = arith.constant 0 : index
    %c0_20 = arith.constant 0 : index
    %37 = vector.load %arg13[%c0_19, %c0_20] : memref<2x64xf32, #tpu.memory_space<vmem>>, vector<2x64xf32>
    tpu.vector_store %arg13[%c0_19, %c0_20], %36 {strides = array<i32>} : memref<2x64xf32, #tpu.memory_space<vmem>>, vector<2x64xf32>,
    %c0_i32_21 = arith.constant 0 : i32
    %38 = arith.cmpi eq, %arg1, %c0_i32_21 : i32
    %39 = arith.extui %38 : i1 to i32
    %c0_i32_22 = arith.constant 0 : i32
    %40 = arith.cmpi ne, %39, %c0_i32_22 : i32
    scf.if %40 {
      %c0_23 = arith.constant 0 : index
      %c0_24 = arith.constant 0 : index
      %41 = vector.load %arg8[%c0_23, %c0_24] : memref<2x16xf32, #tpu.memory_space<vmem>>, vector<2x16xf32>
      %c0_25 = arith.constant 0 : index
      %c0_26 = arith.constant 0 : index
      %42 = vector.load %arg13[%c0_25, %c0_26] : memref<2x64xf32, #tpu.memory_space<vmem>>, vector<2x64xf32>
      %cst_27 = arith.constant dense<0.000000e+00> : vector<16x64xf32>
      %43 = tpu.matmul %41, %42, %cst_27 {dimension_numbers = #tpu.dot_dimension_numbers<[0], [0], [1], [1], [0, 1, 1, 1], [], []>} : vector<2x16xf32>, vector<2x64xf32>, vector<16x64xf32> -> vector<16x64xf32>
      %c0_28 = arith.constant 0 : index
      %c0_29 = arith.constant 0 : index
      %44 = vector.load %arg9[%c0_28, %c0_29] : memref<16x1xf32, #tpu.memory_space<vmem>>, vector<16x1xf32>
      %45 = vector.broadcast %44 : vector<16x1xf32> to vector<16x64xf32>
      %46 = arith.addf %43, %45 : vector<16x64xf32>
      %47 = vector.broadcast %1 : f32 to vector<16x64xf32>
      %48 = arith.mulf %47, %46 : vector<16x64xf32>
      %c0_30 = arith.constant 0 : index
      %c0_31 = arith.constant 0 : index
      %c0_32 = arith.constant 0 : index
      %49 = vector.load %arg11[%c0_30, %c0_31, %c0_32] : memref<1x16x64xf32, #tpu.memory_space<vmem>>, vector<1x16x64xf32>
      %50 = vector.shape_cast %49 : vector<1x16x64xf32> to vector<16x64xf32>
      %51 = vector.shape_cast %48 : vector<16x64xf32> to vector<1x16x64xf32>
      tpu.vector_store %arg11[%c0_30, %c0_31, %c0_32], %51 {strides = array<i32>} : memref<1x16x64xf32, #tpu.memory_space<vmem>>, vector<1x16x64xf32>,
    } else {
    }
    return
  }
  func.func @transform_0(%arg0: i32, %arg1: i32) -> (i32, i32, i32) {
    %c0_i32 = arith.constant 0 : i32
    %c0_i32_0 = arith.constant 0 : i32
    return %arg0, %c0_i32, %arg1 : i32, i32, i32
  }
  func.func @transform_1(%arg0: i32, %arg1: i32) -> (i32, i32, i32) {
    %c0_i32 = arith.constant 0 : i32
    %c0_i32_0 = arith.constant 0 : i32
    %c0_i32_1 = arith.constant 0 : i32
    return %arg0, %c0_i32, %c0_i32_0 : i32, i32, i32
  }
  func.func @transform_2(%arg0: i32, %arg1: i32) -> (i32, i32) {
    %c0_i32 = arith.constant 0 : i32
    %c0_i32_0 = arith.constant 0 : i32
    %c0_i32_1 = arith.constant 0 : i32
    return %c0_i32, %c0_i32_0 : i32, i32
  }
  func.func @transform_3(%arg0: i32, %arg1: i32) -> (i32, i32) {
    %c0_i32 = arith.constant 0 : i32
    %c0_i32_0 = arith.constant 0 : i32
    %c0_i32_1 = arith.constant 0 : i32
    return %c0_i32, %c0_i32_0 : i32, i32
  }
  func.func @transform_4(%arg0: i32, %arg1: i32) -> (i32, i32) {
    %c0_i32 = arith.constant 0 : i32
    %c0_i32_0 = arith.constant 0 : i32
    %c0_i32_1 = arith.constant 0 : i32
    return %c0_i32, %c0_i32_0 : i32, i32
  }
  func.func @transform_5(%arg0: i32, %arg1: i32) -> (i32, i32) {
    %c0_i32 = arith.constant 0 : i32
    %c0_i32_0 = arith.constant 0 : i32
    %c0_i32_1 = arith.constant 0 : i32
    return %c0_i32, %c0_i32_0 : i32, i32
  }
  func.func @transform_6(%arg0: i32, %arg1: i32) -> (i32, i32) {
    %c0_i32 = arith.constant 0 : i32
    %c0_i32_0 = arith.constant 0 : i32
    %c0_i32_1 = arith.constant 0 : i32
    return %c0_i32, %c0_i32_0 : i32, i32
  }
  func.func @transform_7(%arg0: i32, %arg1: i32) -> (i32, i32) {
    %c0_i32 = arith.constant 0 : i32
    %c0_i32_0 = arith.constant 0 : i32
    %c0_i32_1 = arith.constant 0 : i32
    return %c0_i32, %c0_i32_0 : i32, i32
  }
  func.func @transform_8(%arg0: i32, %arg1: i32) -> (i32, i32) {
    %c0_i32 = arith.constant 0 : i32
    %c0_i32_0 = arith.constant 0 : i32
    %c0_i32_1 = arith.constant 0 : i32
    return %c0_i32, %c0_i32_0 : i32, i32
  }
  func.func @transform_9(%arg0: i32, %arg1: i32) -> (i32, i32, i32) {
    %c0_i32 = arith.constant 0 : i32
    %c0_i32_0 = arith.constant 0 : i32
    %c0_i32_1 = arith.constant 0 : i32
    return %arg0, %c0_i32, %c0_i32_0 : i32, i32, i32
  }
}

</mosaic_0001>

<llo_original>
// kernel: tpu_custom_call.1
$region0: #{tpu_custom_call.1}
  #allocation0 [shape = 'u32[]', space=smem, size = 0x4, offset = 0x4, fixed_abs, tag = 'smem constant byte address 0x4 - core index']
  #allocation1 [shape = 'u32[144,128]{1,0:T(1,128)}', space=vmem, size = 0x12000, scoped, tag = 'internal scratch']
  #allocation2 [shape = 'f32[2,64]{1,0:T(2,128)}', space=vmem, size = 0x400, scoped, tag = 'scratch operand']
  #allocation3 [shape = 'f32[2,64]{1,0:T(2,128)}', space=vmem, size = 0x400, scoped, tag = 'scratch operand']
  %s0 = inlined_call_operand.hbm [shape: f32[2,16,64], index: 0, kind: input, shape index: {}]
  %s1 = inlined_call_operand.hbm [shape: f32[2,16,64], index: 1, kind: input, shape index: {}]
  %s2 = inlined_call_operand.hbm [shape: f32[16,5], index: 2, kind: input, shape index: {}]
  %s3 = inlined_call_operand.hbm [shape: f32[4,1], index: 3, kind: input, shape index: {}]
  %s4 = inlined_call_operand.hbm [shape: f32[16,3], index: 4, kind: input, shape index: {}]
  %s5 = inlined_call_operand.hbm [shape: f32[2,1], index: 5, kind: input, shape index: {}]
  %s6 = inlined_call_operand.hbm [shape: f32[2,16], index: 6, kind: input, shape index: {}]
  %s7 = inlined_call_operand.hbm [shape: f32[16,1], index: 7, kind: input, shape index: {}]
  %s8 = inlined_call_operand.hbm [shape: f32[1,2], index: 8, kind: input, shape index: {}]
  %s9 = inlined_call_operand.hbm [shape: f32[2,16,64], index: 9, kind: output, shape index: {}]
  %s10 = sld [smem:[#allocation0]]
  $region113: #{tpu_custom_call.1} parent=0
    _
  %s12 = ssub.s32 1, %s10
  %s13 = scalar_select 0, %s12, %s10
  $region1: #{tpu_custom_call.1} parent=0
    #allocation4 [shape = 'u8[16384]{0}', space=vmem, size = 0x4000, scoped, tag = 'input window, operand 0']
    #allocation5 [shape = 's32[2]{0}', space=sflag, size = 0x8, scoped, tag = 'scoped memory for tpu_custom_call.1']
    #allocation6 [shape = 's32[2]{0}', space=sflag, size = 0x8, scoped, tag = 'scoped memory for tpu_custom_call.1']
    #allocation7 [shape = 's32[2]{0}', space=sflag, size = 0x8, scoped, tag = 'scoped memory for tpu_custom_call.1']
    #allocation8 [shape = 'u8[16384]{0}', space=vmem, size = 0x4000, scoped, tag = 'input window, operand 1']
    #allocation9 [shape = 's32[2]{0}', space=sflag, size = 0x8, scoped, tag = 'scoped memory for tpu_custom_call.1']
    #allocation10 [shape = 'u8[8192]{0}', space=vmem, size = 0x2000, scoped, tag = 'input window, operand 2, single buffered']
    #allocation11 [shape = 'u8[2048]{0}', space=vmem, size = 0x800, scoped, tag = 'input window, operand 3, single buffered']
    #allocation12 [shape = 's32[1]{0}', space=sflag, size = 0x4, scoped, tag = 'scoped memory for tpu_custom_call.1']
    #allocation13 [shape = 'u8[8192]{0}', space=vmem, size = 0x2000, scoped, tag = 'input window, operand 4, single buffered']
    #allocation14 [shape = 'u8[1024]{0}', space=vmem, size = 0x400, scoped, tag = 'input window, operand 5, single buffered']
    #allocation15 [shape = 's32[1]{0}', space=sflag, size = 0x4, scoped, tag = 'scoped memory for tpu_custom_call.1']
    #allocation16 [shape = 'u8[1024]{0}', space=vmem, size = 0x400, scoped, tag = 'input window, operand 6, single buffered']
    #allocation17 [shape = 'u8[8192]{0}', space=vmem, size = 0x2000, scoped, tag = 'input window, operand 7, single buffered']
    #allocation18 [shape = 's32[1]{0}', space=sflag, size = 0x4, scoped, tag = 'scoped memory for tpu_custom_call.1']
    #allocation19 [shape = 'u8[512]{0}', space=smem, size = 0x200, scoped, tag = 'input window, operand 8, single buffered']
    #allocation20 [shape = 'u8[16384]{0}', space=vmem, size = 0x4000, scoped, tag = 'output window, operand 0']
    %14 = vsyncpa [#allocation5], 0
    %s15 = scalar_lea.sflag [#allocation5], 1
    %16 = vsyncpa %s15, 0
    %17 = vsyncpa [#allocation9], 0
    %s18 = scalar_lea.sflag [#allocation9], 1
    %19 = vsyncpa %s18, 0
    %20 = vsyncpa [#allocation12], 0
    %21 = vsyncpa [#allocation15], 0
    %22 = vsyncpa [#allocation18], 0
    %23 = vsyncpa [#allocation7], 0
    %24 = vsyncpa [#allocation6], 0
    %s25 = scalar_lea.sflag [#allocation6], 1
    %26 = vsyncpa %s25, 0
    loop: start=0, step=1, limit=4
    $region2: #{tpu_custom_call.1} parent=1 // loop_pre_header
      _
    $region3: #{tpu_custom_call.1} parent=1 // loop_header
      %s28 = sphi 0, %s32
      %p29 = scmp.ge.s32.totalorder %s28, 4
      %s35 = sphi 0, %s47
      %s36 = sphi 0, %s43
      %s37 = sphi 0, %s35
      %s38 = sphi 0, %s36
      %s39 = sphi 0, %s37
      %s40 = sphi 0, %s38
      %s52 = sphi 0, %s54
      %s55 = sphi 0, %s52
      %s56 = sphi 0, %s55
      %s72 = sphi 0, %s56
      %s78 = sphi 0, %s80
      %s81 = sphi 0, %s78
      %s82 = sphi 0, %s81
      %s98 = sphi 0, %s82
      %s102 = sphi 0, %s102
      %s104 = sphi 0, %s102
      %s105 = sphi 0, %s104
      %s119 = sphi 0, %s105
      %s123 = sphi 0, %s123
      %s125 = sphi 0, %s123
      %s126 = sphi 0, %s125
      %s140 = sphi 0, %s126
      %s144 = sphi 0, %s144
      %s146 = sphi 0, %s144
      %s147 = sphi 0, %s146
      %s161 = sphi 0, %s147
      %s165 = sphi 0, %s165
      %s167 = sphi 0, %s165
      %s168 = sphi 0, %s167
      %s182 = sphi 0, %s168
      %s186 = sphi 0, %s186
      %s188 = sphi 0, %s186
      %s189 = sphi 0, %s188
      %s203 = sphi 0, %s189
      %s207 = sphi 0, %s207
      %s209 = sphi 0, %s207
      %s210 = sphi 0, %s209
      %s224 = sphi 0, %s210
      %s228 = sphi 0, %s228
      %s230 = sphi 0, %s228
      %s231 = sphi 0, %s230
      %s245 = sphi 0, %s231
      %s251 = sphi 0, %s253
      %s254 = sphi 0, %s251
      %s255 = sphi 0, %s254
      %s271 = sphi 0, %s255
    $region4: #{tpu_custom_call.1} parent=1 // loop_header_branch
      %31 = sbr.rel (%p29) target = $region8
    $region5: #{tpu_custom_call.1} parent=1 // loop_body
      %s33 = ssub.s32 %s28, 1
      %s34 = ssub.s32 %s28, 2
      %s41 = sadd.s32 1, %s36
      %p42 = scmp.ge.s32.totalorder %s41, 1
      %s43 = scalar_select %p42, 0, %s41
      %s44 = sadd.s32 1, %s35
      %s45 = scalar_select %p42, %s44, %s35
      %p46 = scmp.ge.s32.totalorder %s45, 2
      %s47 = scalar_select %p46, 0, %s45
      %s48 = ssub.s32 %s35, %s47
      %s49 = ssub.s32 %s36, %s43
      %s50 = sor.u32 %s48, %s49
      %p51 = scmp.eq.s32.totalorder %s50, 0
      %s53 = sadd.s32 %s52, 1
      %s54 = scalar_select %p51, %s52, %s53
      %p57 = pneg %p51
      %p58 = scmp.eq.s32.totalorder %s28, 1
      %p59 = por %p57, %p58
      %p60 = scmp.ne.s32.totalorder %s52, %s55
      %p61 = scmp.eq.s32.totalorder %s28, 0
      %p62 = por %p60, %p61
      %p63 = scmp.ne.s32.totalorder %s52, %s55
      %p64 = scmp.eq.s32.totalorder %s33, 1
      %p65 = por %p63, %p64
      %p66 = scmp.ne.s32.totalorder %s55, %s56
      %p67 = scmp.eq.s32.totalorder %s33, 0
      %p68 = por %p66, %p67
      %p69 = scmp.ne.s32.totalorder %s55, %s56
      %p70 = scmp.eq.s32.totalorder %s34, 1
      %p71 = por %p69, %p70
      %p73 = scmp.ne.s32.totalorder %s56, %s72
      %p74 = scmp.eq.s32.totalorder %s34, 0
      %p75 = por %p73, %p74
      %s76 = ssub.s32 %s35, %s47
      %p77 = scmp.eq.s32.totalorder %s76, 0
      %s79 = sadd.s32 %s78, 1
      %s80 = scalar_select %p77, %s78, %s79
      %p83 = pneg %p77
      %p84 = scmp.eq.s32.totalorder %s28, 1
      %p85 = por %p83, %p84
      %p86 = scmp.ne.s32.totalorder %s78, %s81
      %p87 = scmp.eq.s32.totalorder %s28, 0
      %p88 = por %p86, %p87
      %p89 = scmp.ne.s32.totalorder %s78, %s81
      %p90 = scmp.eq.s32.totalorder %s33, 1
      %p91 = por %p89, %p90
      %p92 = scmp.ne.s32.totalorder %s81, %s82
      %p93 = scmp.eq.s32.totalorder %s33, 0
      %p94 = por %p92, %p93
      %p95 = scmp.ne.s32.totalorder %s81, %s82
      %p96 = scmp.eq.s32.totalorder %s34, 1
      %p97 = por %p95, %p96
      %p99 = scmp.ne.s32.totalorder %s82, %s98
      %p100 = scmp.eq.s32.totalorder %s34, 0
      %p101 = por %p99, %p100
      %s103 = sadd.s32 %s102, 1
      %p106 = scmp.eq.s32.totalorder %s28, 1
      %p107 = scmp.ne.s32.totalorder %s102, %s104
      %p108 = scmp.eq.s32.totalorder %s28, 0
      %p109 = por %p107, %p108
      %p110 = scmp.ne.s32.totalorder %s102, %s104
      %p111 = scmp.eq.s32.totalorder %s33, 1
      %p112 = por %p110, %p111
      %p113 = scmp.ne.s32.totalorder %s104, %s105
      %p114 = scmp.eq.s32.totalorder %s33, 0
      %p115 = por %p113, %p114
      %p116 = scmp.ne.s32.totalorder %s104, %s105
      %p117 = scmp.eq.s32.totalorder %s34, 1
      %p118 = por %p116, %p117
      %p120 = scmp.ne.s32.totalorder %s105, %s119
      %p121 = scmp.eq.s32.totalorder %s34, 0
      %p122 = por %p120, %p121
      %s124 = sadd.s32 %s123, 1
      %p127 = scmp.eq.s32.totalorder %s28, 1
      %p128 = scmp.ne.s32.totalorder %s123, %s125
      %p129 = scmp.eq.s32.totalorder %s28, 0
      %p130 = por %p128, %p129
      %p131 = scmp.ne.s32.totalorder %s123, %s125
      %p132 = scmp.eq.s32.totalorder %s33, 1
      %p133 = por %p131, %p132
      %p134 = scmp.ne.s32.totalorder %s125, %s126
      %p135 = scmp.eq.s32.totalorder %s33, 0
      %p136 = por %p134, %p135
      %p137 = scmp.ne.s32.totalorder %s125, %s126
      %p138 = scmp.eq.s32.totalorder %s34, 1
      %p139 = por %p137, %p138
      %p141 = scmp.ne.s32.totalorder %s126, %s140
      %p142 = scmp.eq.s32.totalorder %s34, 0
      %p143 = por %p141, %p142
      %s145 = sadd.s32 %s144, 1
      %p148 = scmp.eq.s32.totalorder %s28, 1
      %p149 = scmp.ne.s32.totalorder %s144, %s146
      %p150 = scmp.eq.s32.totalorder %s28, 0
      %p151 = por %p149, %p150
      %p152 = scmp.ne.s32.totalorder %s144, %s146
      %p153 = scmp.eq.s32.totalorder %s33, 1
      %p154 = por %p152, %p153
      %p155 = scmp.ne.s32.totalorder %s146, %s147
      %p156 = scmp.eq.s32.totalorder %s33, 0
      %p157 = por %p155, %p156
      %p158 = scmp.ne.s32.totalorder %s146, %s147
      %p159 = scmp.eq.s32.totalorder %s34, 1
      %p160 = por %p158, %p159
      %p162 = scmp.ne.s32.totalorder %s147, %s161
      %p163 = scmp.eq.s32.totalorder %s34, 0
      %p164 = por %p162, %p163
      %s166 = sadd.s32 %s165, 1
      %p169 = scmp.eq.s32.totalorder %s28, 1
      %p170 = scmp.ne.s32.totalorder %s165, %s167
      %p171 = scmp.eq.s32.totalorder %s28, 0
      %p172 = por %p170, %p171
      %p173 = scmp.ne.s32.totalorder %s165, %s167
      %p174 = scmp.eq.s32.totalorder %s33, 1
      %p175 = por %p173, %p174
      %p176 = scmp.ne.s32.totalorder %s167, %s168
      %p177 = scmp.eq.s32.totalorder %s33, 0
      %p178 = por %p176, %p177
      %p179 = scmp.ne.s32.totalorder %s167, %s168
      %p180 = scmp.eq.s32.totalorder %s34, 1
      %p181 = por %p179, %p180
      %p183 = scmp.ne.s32.totalorder %s168, %s182
      %p184 = scmp.eq.s32.totalorder %s34, 0
      %p185 = por %p183, %p184
      %s187 = sadd.s32 %s186, 1
      %p190 = scmp.eq.s32.totalorder %s28, 1
      %p191 = scmp.ne.s32.totalorder %s186, %s188
      %p192 = scmp.eq.s32.totalorder %s28, 0
      %p193 = por %p191, %p192
      %p194 = scmp.ne.s32.totalorder %s186, %s188
      %p195 = scmp.eq.s32.totalorder %s33, 1
      %p196 = por %p194, %p195
      %p197 = scmp.ne.s32.totalorder %s188, %s189
      %p198 = scmp.eq.s32.totalorder %s33, 0
      %p199 = por %p197, %p198
      %p200 = scmp.ne.s32.totalorder %s188, %s189
      %p201 = scmp.eq.s32.totalorder %s34, 1
      %p202 = por %p200, %p201
      %p204 = scmp.ne.s32.totalorder %s189, %s203
      %p205 = scmp.eq.s32.totalorder %s34, 0
      %p206 = por %p204, %p205
      %s208 = sadd.s32 %s207, 1
      %p211 = scmp.eq.s32.totalorder %s28, 1
      %p212 = scmp.ne.s32.totalorder %s207, %s209
      %p213 = scmp.eq.s32.totalorder %s28, 0
      %p214 = por %p212, %p213
      %p215 = scmp.ne.s32.totalorder %s207, %s209
      %p216 = scmp.eq.s32.totalorder %s33, 1
      %p217 = por %p215, %p216
      %p218 = scmp.ne.s32.totalorder %s209, %s210
      %p219 = scmp.eq.s32.totalorder %s33, 0
      %p220 = por %p218, %p219
      %p221 = scmp.ne.s32.totalorder %s209, %s210
      %p222 = scmp.eq.s32.totalorder %s34, 1
      %p223 = por %p221, %p222
      %p225 = scmp.ne.s32.totalorder %s210, %s224
      %p226 = scmp.eq.s32.totalorder %s34, 0
      %p227 = por %p225, %p226
      %s229 = sadd.s32 %s228, 1
      %p232 = scmp.eq.s32.totalorder %s28, 1
      %p233 = scmp.ne.s32.totalorder %s228, %s230
      %p234 = scmp.eq.s32.totalorder %s28, 0
      %p235 = por %p233, %p234
      %p236 = scmp.ne.s32.totalorder %s228, %s230
      %p237 = scmp.eq.s32.totalorder %s33, 1
      %p238 = por %p236, %p237
      %p239 = scmp.ne.s32.totalorder %s230, %s231
      %p240 = scmp.eq.s32.totalorder %s33, 0
      %p241 = por %p239, %p240
      %p242 = scmp.ne.s32.totalorder %s230, %s231
      %p243 = scmp.eq.s32.totalorder %s34, 1
      %p244 = por %p242, %p243
      %p246 = scmp.ne.s32.totalorder %s231, %s245
      %p247 = scmp.eq.s32.totalorder %s34, 0
      %p248 = por %p246, %p247
      %s249 = ssub.s32 %s35, %s47
      %p250 = scmp.eq.s32.totalorder %s249, 0
      %s252 = sadd.s32 %s251, 1
      %s253 = scalar_select %p250, %s251, %s252
      %p256 = pneg %p250
      %p257 = scmp.eq.s32.totalorder %s28, 1
      %p258 = por %p256, %p257
      %p259 = scmp.ne.s32.totalorder %s251, %s254
      %p260 = scmp.eq.s32.totalorder %s28, 0
      %p261 = por %p259, %p260
      %p262 = scmp.ne.s32.totalorder %s251, %s254
      %p263 = scmp.eq.s32.totalorder %s33, 1
      %p264 = por %p262, %p263
      %p265 = scmp.ne.s32.totalorder %s254, %s255
      %p266 = scmp.eq.s32.totalorder %s33, 0
      %p267 = por %p265, %p266
      %p268 = scmp.ne.s32.totalorder %s254, %s255
      %p269 = scmp.eq.s32.totalorder %s34, 1
      %p270 = por %p268, %p269
      %p272 = scmp.ne.s32.totalorder %s255, %s271
      %p273 = scmp.eq.s32.totalorder %s34, 0
      %p274 = por %p272, %p273
      %p275 = scmp.le.s32.totalorder 1, %s28
      %p276 = scmp.lt.s32.totalorder %s28, 3
      %p277 = pnand %p275, %p276
      %p278 = pneg %p277
      // Predicated region
      $region9: #{tpu_custom_call.1} parent=5 // pred_check
        _
      $region10: #{tpu_custom_call.1} parent=5 // pred_check_branch
        %280 = sbr.rel (%p277) target = $region12
      $region11: #{tpu_custom_call.1} parent=5 // pred_region
        %s281 = ssub.s32 %s28, 1
        // Predicated region
        $region13: #{tpu_custom_call.1} parent=11 // pred_check
          %p282 = pneg %p115
        $region14: #{tpu_custom_call.1} parent=11 // pred_check_branch
          %284 = sbr.rel (%p282) target = $region16
        $region15: #{tpu_custom_call.1} parent=11 // pred_region
          %s286 = ssub.s32 256, 256
          %287 = vsyncadd [#allocation9], %s286
          %s288 = sshll.u32 [#allocation10], 4
          %s289 = int_to_ptr.vmem [resolvable:$true] %s288
          %294 = dma.hbm_to_vmem [thread:$0]  %s2, 256, %s289, [#allocation9], 128, 128, 8
        $region16: #{tpu_custom_call.1} parent=11 // pred_fallthru
          _
        // Predicated region
        $region17: #{tpu_custom_call.1} parent=11 // pred_check
          %p295 = pneg %p136
        $region18: #{tpu_custom_call.1} parent=11 // pred_check_branch
          %297 = sbr.rel (%p295) target = $region20
        $region19: #{tpu_custom_call.1} parent=11 // pred_region
          %s299 = ssub.s32 64, 64
          %300 = vsyncadd [#allocation12], %s299
          %s302 = sshll.u32 [#allocation11], 4
          %s303 = int_to_ptr.vmem [resolvable:$true] %s302
          %305 = dma.hbm_to_vmem [thread:$0]  %s3, 64, %s303, [#allocation12]
        $region20: #{tpu_custom_call.1} parent=11 // pred_fallthru
          _
        // Predicated region
        $region21: #{tpu_custom_call.1} parent=11 // pred_check
          %p306 = pneg %p157
        $region22: #{tpu_custom_call.1} parent=11 // pred_check_branch
          %308 = sbr.rel (%p306) target = $region24
        $region23: #{tpu_custom_call.1} parent=11 // pred_region
          %s310 = ssub.s32 256, 256
          %311 = vsyncadd [#allocation12], %s310
          %s312 = sshll.u32 [#allocation13], 4
          %s313 = int_to_ptr.vmem [resolvable:$true] %s312
          %318 = dma.hbm_to_vmem [thread:$0]  %s4, 256, %s313, [#allocation12], 128, 128, 8
        $region24: #{tpu_custom_call.1} parent=11 // pred_fallthru
          _
        // Predicated region
        $region25: #{tpu_custom_call.1} parent=11 // pred_check
          %p319 = pneg %p178
        $region26: #{tpu_custom_call.1} parent=11 // pred_check_branch
          %321 = sbr.rel (%p319) target = $region28
        $region27: #{tpu_custom_call.1} parent=11 // pred_region
          %s323 = ssub.s32 32, 32
          %324 = vsyncadd [#allocation15], %s323
          %s326 = sshll.u32 [#allocation14], 4
          %s327 = int_to_ptr.vmem [resolvable:$true] %s326
          %329 = dma.hbm_to_vmem [thread:$0]  %s5, 32, %s327, [#allocation15]
        $region28: #{tpu_custom_call.1} parent=11 // pred_fallthru
          _
        // Predicated region
        $region29: #{tpu_custom_call.1} parent=11 // pred_check
          %p330 = pneg %p199
        $region30: #{tpu_custom_call.1} parent=11 // pred_check_branch
          %332 = sbr.rel (%p330) target = $region32
        $region31: #{tpu_custom_call.1} parent=11 // pred_region
          %s334 = ssub.s32 32, 32
          %335 = vsyncadd [#allocation15], %s334
          %s337 = sshll.u32 [#allocation16], 4
          %s338 = int_to_ptr.vmem [resolvable:$true] %s337
          %340 = dma.hbm_to_vmem [thread:$0]  %s6, 32, %s338, [#allocation15]
        $region32: #{tpu_custom_call.1} parent=11 // pred_fallthru
          _
        // Predicated region
        $region33: #{tpu_custom_call.1} parent=11 // pred_check
          %p341 = pneg %p220
        $region34: #{tpu_custom_call.1} parent=11 // pred_check_branch
          %343 = sbr.rel (%p341) target = $region36
        $region35: #{tpu_custom_call.1} parent=11 // pred_region
          %s345 = ssub.s32 256, 256
          %346 = vsyncadd [#allocation18], %s345
          %s347 = sshll.u32 [#allocation17], 4
          %s348 = int_to_ptr.vmem [resolvable:$true] %s347
          %353 = dma.hbm_to_vmem [thread:$0]  %s7, 256, %s348, [#allocation18], 128, 128, 8
        $region36: #{tpu_custom_call.1} parent=11 // pred_fallthru
          _
        // Predicated region
        $region37: #{tpu_custom_call.1} parent=11 // pred_check
          %p354 = pneg %p241
        $region38: #{tpu_custom_call.1} parent=11 // pred_check_branch
          %356 = sbr.rel (%p354) target = $region40
        $region39: #{tpu_custom_call.1} parent=11 // pred_region
          %s358 = ssub.s32 16, 16
          %359 = vsyncadd [#allocation7], %s358
          %362 = dma.hbm_to_smem %s8, 16, [#allocation19], [#allocation7]
        $region40: #{tpu_custom_call.1} parent=11 // pred_fallthru
          _
      $region12: #{tpu_custom_call.1} parent=5 // pred_fallthru
        _
      %p363 = scmp.lt.s32.totalorder %s28, 2
      // Predicated region
      $region41: #{tpu_custom_call.1} parent=5 // pred_check
        %p364 = pneg %p363
      $region42: #{tpu_custom_call.1} parent=5 // pred_check_branch
        %366 = sbr.rel (%p364) target = $region44
      $region43: #{tpu_custom_call.1} parent=5 // pred_region
        // Predicated region
        $region45: #{tpu_custom_call.1} parent=43 // pred_check
          %p367 = pneg %p62
        $region46: #{tpu_custom_call.1} parent=43 // pred_check_branch
          %369 = sbr.rel (%p367) target = $region48
        $region47: #{tpu_custom_call.1} parent=43 // pred_region
          %s370 = sand.u32 %s52, 1
          %s371 = scalar_lea.sflag [#allocation5], %s370
          %s372 = sand.u32 %s52, 1
          %s373 = smul.addr %s372, 16
          %s374 = scalar_lea.vmem [#allocation4], %s373
          %s376 = ssub.s32 256, 256
          %377 = vsyncadd %s371, %s376
          %s378 = smul.addr %s35, 2
          %s379 = sadd.s32 %s36, %s378
          %s380 = smul.addr %s379, 128
          %s381 = scalar_lea.hbm %s0, %s380
          %s382 = sshll.u32 %s374, 4
          %s383 = int_to_ptr.vmem [resolvable:$true] %s382
          %388 = dma.hbm_to_vmem [thread:$0]  %s381, 256, %s383, %s371, 128, 128, 8
        $region48: #{tpu_custom_call.1} parent=43 // pred_fallthru
          _
        // Predicated region
        $region49: #{tpu_custom_call.1} parent=43 // pred_check
          %p389 = pneg %p88
        $region50: #{tpu_custom_call.1} parent=43 // pred_check_branch
          %391 = sbr.rel (%p389) target = $region52
        $region51: #{tpu_custom_call.1} parent=43 // pred_region
          %s392 = sand.u32 %s28, 1
          %s393 = scalar_lea.sflag [#allocation9], %s392
          %s394 = sand.u32 %s78, 1
          %s395 = smul.addr %s394, 16
          %s396 = scalar_lea.vmem [#allocation8], %s395
          %s398 = ssub.s32 256, 256
          %399 = vsyncadd %s393, %s398
          %s400 = smul.addr %s35, 2
          %s401 = smul.addr %s400, 128
          %s402 = scalar_lea.hbm %s1, %s401
          %s403 = sshll.u32 %s396, 4
          %s404 = int_to_ptr.vmem [resolvable:$true] %s403
          %409 = dma.hbm_to_vmem [thread:$0]  %s402, 256, %s404, %s393, 128, 128, 8
        $region52: #{tpu_custom_call.1} parent=43 // pred_fallthru
          _
      $region44: #{tpu_custom_call.1} parent=5 // pred_fallthru
        _
      %p410 = scmp.le.s32.totalorder 1, %s28
      %p411 = scmp.lt.s32.totalorder %s28, 3
      %p412 = pnand %p410, %p411
      %p413 = pneg %p412
      // Predicated region
      $region53: #{tpu_custom_call.1} parent=5 // pred_check
        _
      $region54: #{tpu_custom_call.1} parent=5 // pred_check_branch
        %415 = sbr.rel (%p412) target = $region56
      $region55: #{tpu_custom_call.1} parent=5 // pred_region
        %s416 = ssub.s32 %s28, 1
        %s417 = sand.u32 %s55, 1
        %s418 = scalar_lea.sflag [#allocation5], %s417
        %s419 = sand.u32 %s55, 1
        %s420 = smul.addr %s419, 16
        %s421 = scalar_lea.vmem [#allocation4], %s420
        // Predicated region
        $region57: #{tpu_custom_call.1} parent=55 // pred_check
          %p422 = pneg %p68
        $region58: #{tpu_custom_call.1} parent=55 // pred_check_branch
          %424 = sbr.rel (%p422) target = $region60
        $region59: #{tpu_custom_call.1} parent=55 // pred_region
          %425 = dma.done %s418, 256
        $region60: #{tpu_custom_call.1} parent=55 // pred_fallthru
          _
        %s426 = sand.u32 %s33, 1
        %s427 = scalar_lea.sflag [#allocation9], %s426
        %s428 = sand.u32 %s81, 1
        %s429 = smul.addr %s428, 16
        %s430 = scalar_lea.vmem [#allocation8], %s429
        // Predicated region
        $region61: #{tpu_custom_call.1} parent=55 // pred_check
          %p431 = pneg %p94
        $region62: #{tpu_custom_call.1} parent=55 // pred_check_branch
          %433 = sbr.rel (%p431) target = $region64
        $region63: #{tpu_custom_call.1} parent=55 // pred_region
          %434 = dma.done %s427, 256
        $region64: #{tpu_custom_call.1} parent=55 // pred_fallthru
          _
        // Predicated region
        $region65: #{tpu_custom_call.1} parent=55 // pred_check
          %p435 = pneg %p115
        $region66: #{tpu_custom_call.1} parent=55 // pred_check_branch
          %437 = sbr.rel (%p435) target = $region68
        $region67: #{tpu_custom_call.1} parent=55 // pred_region
          %438 = dma.done [#allocation9], 256
        $region68: #{tpu_custom_call.1} parent=55 // pred_fallthru
          _
        // Predicated region
        $region69: #{tpu_custom_call.1} parent=55 // pred_check
          %p439 = pneg %p136
        $region70: #{tpu_custom_call.1} parent=55 // pred_check_branch
          %441 = sbr.rel (%p439) target = $region72
        $region71: #{tpu_custom_call.1} parent=55 // pred_region
          %442 = dma.done [#allocation12], 64
        $region72: #{tpu_custom_call.1} parent=55 // pred_fallthru
          _
        // Predicated region
        $region73: #{tpu_custom_call.1} parent=55 // pred_check
          %p443 = pneg %p157
        $region74: #{tpu_custom_call.1} parent=55 // pred_check_branch
          %445 = sbr.rel (%p443) target = $region76
        $region75: #{tpu_custom_call.1} parent=55 // pred_region
          %446 = dma.done [#allocation12], 256
        $region76: #{tpu_custom_call.1} parent=55 // pred_fallthru
          _
        // Predicated region
        $region77: #{tpu_custom_call.1} parent=55 // pred_check
          %p447 = pneg %p178
        $region78: #{tpu_custom_call.1} parent=55 // pred_check_branch
          %449 = sbr.rel (%p447) target = $region80
        $region79: #{tpu_custom_call.1} parent=55 // pred_region
          %450 = dma.done [#allocation15], 32
        $region80: #{tpu_custom_call.1} parent=55 // pred_fallthru
          _
        // Predicated region
        $region81: #{tpu_custom_call.1} parent=55 // pred_check
          %p451 = pneg %p199
        $region82: #{tpu_custom_call.1} parent=55 // pred_check_branch
          %453 = sbr.rel (%p451) target = $region84
        $region83: #{tpu_custom_call.1} parent=55 // pred_region
          %454 = dma.done [#allocation15], 32
        $region84: #{tpu_custom_call.1} parent=55 // pred_fallthru
          _
        // Predicated region
        $region85: #{tpu_custom_call.1} parent=55 // pred_check
          %p455 = pneg %p220
        $region86: #{tpu_custom_call.1} parent=55 // pred_check_branch
          %457 = sbr.rel (%p455) target = $region88
        $region87: #{tpu_custom_call.1} parent=55 // pred_region
          %458 = dma.done [#allocation18], 256
        $region88: #{tpu_custom_call.1} parent=55 // pred_fallthru
          _
        // Predicated region
        $region89: #{tpu_custom_call.1} parent=55 // pred_check
          %p459 = pneg %p241
        $region90: #{tpu_custom_call.1} parent=55 // pred_check_branch
          %461 = sbr.rel (%p459) target = $region92
        $region91: #{tpu_custom_call.1} parent=55 // pred_region
          %462 = dma.done [#allocation7], 16
        $region92: #{tpu_custom_call.1} parent=55 // pred_fallthru
          _
        %463 = sfence
        %s464 = sand.u32 %s55, 1
        %s465 = scalar_lea.sflag [#allocation5], %s464
        %s466 = sand.u32 %s55, 1
        %s467 = smul.addr %s466, 16
        %s468 = scalar_lea.vmem [#allocation4], %s467
        %p469 = pneg %p68
        %p470 = pneg %p65
        %s471 = sand.u32 %s33, 1
        %s472 = scalar_lea.sflag [#allocation9], %s471
        %s473 = sand.u32 %s81, 1
        %s474 = smul.addr %s473, 16
        %s475 = scalar_lea.vmem [#allocation8], %s474
        %p476 = pneg %p94
        %p477 = pneg %p91
        %p478 = pneg %p115
        %p479 = pneg %p112
        %p480 = pneg %p136
        %p481 = pneg %p133
        %p482 = pneg %p157
        %p483 = pneg %p154
        %p484 = pneg %p178
        %p485 = pneg %p175
        %p486 = pneg %p199
        %p487 = pneg %p196
        %p488 = pneg %p220
        %p489 = pneg %p217
        %p490 = pneg %p241
        %p491 = pneg %p238
        %p492 = pneg %p267
        %p493 = pneg %p264
        %s494 = sand.u32 %s254, 1
        %s495 = scalar_lea.sflag [#allocation6], %s494
        %s496 = sand.u32 %s254, 1
        %s497 = smul.addr %s496, 16
        %s498 = scalar_lea.vmem [#allocation20], %s497
        %s499 = sld [smem:[#allocation19]]
        %s500 = sld [smem:[#allocation19 + $0x1]]
        %p501 = scmp.eq.s32.totalorder %s38, 0
        // Predicated region
        $region93: #{tpu_custom_call.1} parent=55 // pred_check
          %p502 = pneg %p501
        $region94: #{tpu_custom_call.1} parent=55 // pred_check_branch
          %504 = sbr.rel (%p502) target = $region96
        $region95: #{tpu_custom_call.1} parent=55 // pred_region
          %v505 = vld [vmem:[%s430] sm:$0xff]
          %v506 = vld [vmem:[%s430 + $0x8] sm:$0xff]
          %v507 = vld [vmem:[#allocation13] sm:$0xff]
          %v508 = vld [vmem:[#allocation13 + $0x8] sm:$0xff]
          %509 = vxpose.xlu0.b32.start [1/16] %v507, 128
          %510 = vxpose.xlu0.b32.cont [2/16] %v508, 128
          %511 = vxpose.xlu0.b32.cont [3/16] 0.0, 128
          %512 = vxpose.xlu0.b32.cont [4/16] 0.0, 128
          %513 = vxpose.xlu0.b32.cont [5/16] 0.0, 128
          %514 = vxpose.xlu0.b32.cont [6/16] 0.0, 128
          %515 = vxpose.xlu0.b32.cont [7/16] 0.0, 128
          %516 = vxpose.xlu0.b32.cont [8/16] 0.0, 128
          %517 = vxpose.xlu0.b32.cont [9/16] 0.0, 128
          %518 = vxpose.xlu0.b32.cont [10/16] 0.0, 128
          %519 = vxpose.xlu0.b32.cont [11/16] 0.0, 128
          %520 = vxpose.xlu0.b32.cont [12/16] 0.0, 128
          %521 = vxpose.xlu0.b32.cont [13/16] 0.0, 128
          %522 = vxpose.xlu0.b32.cont [14/16] 0.0, 128
          %523 = vxpose.xlu0.b32.cont [15/16] 0.0, 128
          %524 = vxpose.xlu0.b32.end [16/16] 0.0, 128
          %v525 = vpop.trf.xlu0
          %v526 = vpop.trf.xlu0
          %v527 = vpop.trf.xlu0
          %v528 = vpop.trf.xlu0
          %v529 = vpop.trf.xlu0
          %v530 = vpop.trf.xlu0
          %v531 = vpop.trf.xlu0
          %v532 = vpop.trf.xlu0
          %v533 = vpop.trf.xlu0
          %v534 = vpop.trf.xlu0
          %v535 = vpop.trf.xlu0
          %v536 = vpop.trf.xlu0
          %v537 = vpop.trf.xlu0
          %v538 = vpop.trf.xlu0
          %v539 = vpop.trf.xlu0
          %v540 = vpop.trf.xlu0
          %vm541 = vcmask 130048
          %v543 = vsel %vm541, %v525, 0
          %545 = vmatprep.subr.mxu0 0.0
          %546 = vmatpush1.msra.mxu0 %v505
          %547 = vmatprep.subr.mxu0 0.0
          %548 = vmatpush1.msra.mxu0 %v506
          %549 = vmatprep.subr.mxu0 0.0
          %550 = vmatpush1.msra.mxu0 0.0
          %551 = vmatprep.subr.mxu0 0.0
          %552 = vmatpush1.msra.mxu0 0.0
          %553 = vmatprep.subr.mxu0 0.0
          %554 = vmatpush1.msra.mxu0 0.0
          %555 = vmatprep.subr.mxu0 0.0
          %556 = vmatpush1.msra.mxu0 0.0
          %557 = vmatprep.subr.mxu0 0.0
          %558 = vmatpush1.msra.mxu0 0.0
          %559 = vmatprep.subr.mxu0 0.0
          %560 = vmatpush1.msra.mxu0 0.0
          %561 = vmatprep.subr.mxu0 0.0
          %562 = vmatpush1.msra.mxu0 0.0
          %563 = vmatprep.subr.mxu0 0.0
          %564 = vmatpush1.msra.mxu0 0.0
          %565 = vmatprep.subr.mxu0 0.0
          %566 = vmatpush1.msra.mxu0 0.0
          %567 = vmatprep.subr.mxu0 0.0
          %568 = vmatpush1.msra.mxu0 0.0
          %569 = vmatprep.subr.mxu0 0.0
          %570 = vmatpush1.msra.mxu0 0.0
          %571 = vmatprep.subr.mxu0 0.0
          %572 = vmatpush1.msra.mxu0 0.0
          %573 = vmatprep.subr.mxu0 0.0
          %574 = vmatpush1.msra.mxu0 0.0
          %575 = vmatprep.subr.mxu0 0.0
          %576 = vmatpush1.msra.mxu0 0.0
          %577 = vmatprep.subr.mxu0 0.0
          %578 = vmatpush1.msra.mxu0 0.0
          %579 = vmatprep.subr.mxu0 0.0
          %580 = vmatpush1.msra.mxu0 0.0
          %581 = vmatprep.subr.mxu0 0.0
          %582 = vmatpush1.msra.mxu0 0.0
          %583 = vmatprep.subr.mxu0 0.0
          %584 = vmatpush1.msra.mxu0 0.0
          %585 = vmatprep.subr.mxu0 0.0
          %586 = vmatpush1.msra.mxu0 0.0
          %587 = vmatprep.subr.mxu0 0.0
          %588 = vmatpush1.msra.mxu0 0.0
          %589 = vmatprep.subr.mxu0 0.0
          %590 = vmatpush1.msra.mxu0 0.0
          %591 = vmatprep.subr.mxu0 0.0
          %592 = vmatpush1.msra.mxu0 0.0
          %593 = vmatprep.subr.mxu0 0.0
          %594 = vmatpush1.msra.mxu0 0.0
          %595 = vmatprep.subr.mxu0 0.0
          %596 = vmatpush1.msra.mxu0 0.0
          %597 = vmatprep.subr.mxu0 0.0
          %598 = vmatpush1.msra.mxu0 0.0
          %599 = vmatprep.subr.mxu0 0.0
          %600 = vmatpush1.msra.mxu0 0.0
          %601 = vmatprep.subr.mxu0 0.0
          %602 = vmatpush1.msra.mxu0 0.0
          %603 = vmatprep.subr.mxu0 0.0
          %604 = vmatpush1.msra.mxu0 0.0
          %605 = vmatprep.subr.mxu0 0.0
          %606 = vmatpush1.msra.mxu0 0.0
          %607 = vmatprep.subr.mxu0 0.0
          %608 = vmatpush1.msra.mxu0 0.0
          %609 = vmatprep.mubr.f32.mxu0 0.0
          %610 = vmatmul.mubr.f32.gmra.mrb[0].mxu0 %v543
          %v611 = vpop.f32.mrb[0].mxu0
          %v612 = vadd.f32 0.0, %v611
          %v613 = vpop.f32.mrb[0].mxu0
          %614 = vdwg.mxu0
          %v615 = vstv %s499
          %v616 = vadd.f32 %v612, %v615
          %v617 = vlaneseq
          %v618 = vshrl.u32 %v617, 7
          %v619 = vsub.s32 2, %v618
          %v620 = vrot.slane %v616, %v619
          %v621 = vmul.f32 %v620, %v612
          %v622 = vld [vmem:[#allocation14] sm:$0x3]
          %624 = vset.pattern.permute.xlu0 0
          %625 = vperm.xlu0 %624, %v622
          %v626 = vpop.permute.xlu0 %625
          %v628 = vadd.f32 %v621, %v626
          %vm629 = vcmask 517120
          %630 = vst.msk [vmem:[#allocation2] sm:$0x3] %vm629, %v628
          %631 = vst.msk [vmem:[#allocation3] sm:$0x3] %vm629, 0.0
        $region96: #{tpu_custom_call.1} parent=55 // pred_fallthru
          _
        %v632 = vld [vmem:[%s421] sm:$0xff]
        %v633 = vld [vmem:[%s421 + $0x8] sm:$0xff]
        %v634 = vld [vmem:[#allocation10] sm:$0xff]
        %v635 = vld [vmem:[#allocation10 + $0x8] sm:$0xff]
        %636 = vxpose.xlu0.b32.start [1/16] %v634, 128
        %637 = vxpose.xlu0.b32.cont [2/16] %v635, 128
        %638 = vxpose.xlu0.b32.cont [3/16] 0.0, 128
        %639 = vxpose.xlu0.b32.cont [4/16] 0.0, 128
        %640 = vxpose.xlu0.b32.cont [5/16] 0.0, 128
        %641 = vxpose.xlu0.b32.cont [6/16] 0.0, 128
        %642 = vxpose.xlu0.b32.cont [7/16] 0.0, 128
        %643 = vxpose.xlu0.b32.cont [8/16] 0.0, 128
        %644 = vxpose.xlu0.b32.cont [9/16] 0.0, 128
        %645 = vxpose.xlu0.b32.cont [10/16] 0.0, 128
        %646 = vxpose.xlu0.b32.cont [11/16] 0.0, 128
        %647 = vxpose.xlu0.b32.cont [12/16] 0.0, 128
        %648 = vxpose.xlu0.b32.cont [13/16] 0.0, 128
        %649 = vxpose.xlu0.b32.cont [14/16] 0.0, 128
        %650 = vxpose.xlu0.b32.cont [15/16] 0.0, 128
        %651 = vxpose.xlu0.b32.end [16/16] 0.0, 128
        %v652 = vpop.trf.xlu0
        %v653 = vpop.trf.xlu0
        %v654 = vpop.trf.xlu0
        %v655 = vpop.trf.xlu0
        %v656 = vpop.trf.xlu0
        %v657 = vpop.trf.xlu0
        %v658 = vpop.trf.xlu0
        %v659 = vpop.trf.xlu0
        %v660 = vpop.trf.xlu0
        %v661 = vpop.trf.xlu0
        %v662 = vpop.trf.xlu0
        %v663 = vpop.trf.xlu0
        %v664 = vpop.trf.xlu0
        %v665 = vpop.trf.xlu0
        %v666 = vpop.trf.xlu0
        %v667 = vpop.trf.xlu0
        %vm668 = vcmask 130048
        %v670 = vsel %vm668, %v652, 0
        %672 = vmatprep.subr.mxu0 0.0
        %673 = vmatpush1.msra.mxu0 %v632
        %674 = vmatprep.subr.mxu0 0.0
        %675 = vmatpush1.msra.mxu0 %v633
        %676 = vmatprep.subr.mxu0 0.0
        %677 = vmatpush1.msra.mxu0 0.0
        %678 = vmatprep.subr.mxu0 0.0
        %679 = vmatpush1.msra.mxu0 0.0
        %680 = vmatprep.subr.mxu0 0.0
        %681 = vmatpush1.msra.mxu0 0.0
        %682 = vmatprep.subr.mxu0 0.0
        %683 = vmatpush1.msra.mxu0 0.0
        %684 = vmatprep.subr.mxu0 0.0
        %685 = vmatpush1.msra.mxu0 0.0
        %686 = vmatprep.subr.mxu0 0.0
        %687 = vmatpush1.msra.mxu0 0.0
        %688 = vmatprep.subr.mxu0 0.0
        %689 = vmatpush1.msra.mxu0 0.0
        %690 = vmatprep.subr.mxu0 0.0
        %691 = vmatpush1.msra.mxu0 0.0
        %692 = vmatprep.subr.mxu0 0.0
        %693 = vmatpush1.msra.mxu0 0.0
        %694 = vmatprep.subr.mxu0 0.0
        %695 = vmatpush1.msra.mxu0 0.0
        %696 = vmatprep.subr.mxu0 0.0
        %697 = vmatpush1.msra.mxu0 0.0
        %698 = vmatprep.subr.mxu0 0.0
        %699 = vmatpush1.msra.mxu0 0.0
        %700 = vmatprep.subr.mxu0 0.0
        %701 = vmatpush1.msra.mxu0 0.0
        %702 = vmatprep.subr.mxu0 0.0
        %703 = vmatpush1.msra.mxu0 0.0
        %704 = vmatprep.subr.mxu0 0.0
        %705 = vmatpush1.msra.mxu0 0.0
        %706 = vmatprep.subr.mxu0 0.0
        %707 = vmatpush1.msra.mxu0 0.0
        %708 = vmatprep.subr.mxu0 0.0
        %709 = vmatpush1.msra.mxu0 0.0
        %710 = vmatprep.subr.mxu0 0.0
        %711 = vmatpush1.msra.mxu0 0.0
        %712 = vmatprep.subr.mxu0 0.0
        %713 = vmatpush1.msra.mxu0 0.0
        %714 = vmatprep.subr.mxu0 0.0
        %715 = vmatpush1.msra.mxu0 0.0
        %716 = vmatprep.subr.mxu0 0.0
        %717 = vmatpush1.msra.mxu0 0.0
        %718 = vmatprep.subr.mxu0 0.0
        %719 = vmatpush1.msra.mxu0 0.0
        %720 = vmatprep.subr.mxu0 0.0
        %721 = vmatpush1.msra.mxu0 0.0
        %722 = vmatprep.subr.mxu0 0.0
        %723 = vmatpush1.msra.mxu0 0.0
        %724 = vmatprep.subr.mxu0 0.0
        %725 = vmatpush1.msra.mxu0 0.0
        %726 = vmatprep.subr.mxu0 0.0
        %727 = vmatpush1.msra.mxu0 0.0
        %728 = vmatprep.subr.mxu0 0.0
        %729 = vmatpush1.msra.mxu0 0.0
        %730 = vmatprep.subr.mxu0 0.0
        %731 = vmatpush1.msra.mxu0 0.0
        %732 = vmatprep.subr.mxu0 0.0
        %733 = vmatpush1.msra.mxu0 0.0
        %734 = vmatprep.subr.mxu0 0.0
        %735 = vmatpush1.msra.mxu0 0.0
        %736 = vmatprep.mubr.f32.mxu0 0.0
        %737 = vmatmul.mubr.f32.gmra.mrb[0].mxu0 %v670
        %v738 = vpop.f32.mrb[0].mxu0
        %v739 = vadd.f32 0.0, %v738
        %v740 = vpop.f32.mrb[0].mxu0
        %741 = vdwg.mxu0
        %v742 = vstv %s499
        %v743 = vadd.f32 %v739, %v742
        %v744 = vlaneseq
        %v745 = vshrl.u32 %v744, 7
        %v746 = vsub.s32 4, %v745
        %v747 = vrot.slane %v743, %v746
        %v748 = vmul.f32 %v747, %v739
        %v749 = vld [vmem:[#allocation11] sm:$0xf]
        %751 = vset.pattern.permute.xlu0 0
        %752 = vperm.xlu0 %751, %v749
        %v753 = vpop.permute.xlu0 %752
        %v755 = vadd.f32 %v748, %v753
        %v756 = vld [vmem:[#allocation2] sm:$0x3]
        %757 = vxpose.xlu0.b32.start [1/16] %v755, 128
        %758 = vxpose.xlu0.b32.cont [2/16] 0.0, 128
        %759 = vxpose.xlu0.b32.cont [3/16] 0.0, 128
        %760 = vxpose.xlu0.b32.cont [4/16] 0.0, 128
        %761 = vxpose.xlu0.b32.cont [5/16] 0.0, 128
        %762 = vxpose.xlu0.b32.cont [6/16] 0.0, 128
        %763 = vxpose.xlu0.b32.cont [7/16] 0.0, 128
        %764 = vxpose.xlu0.b32.cont [8/16] 0.0, 128
        %765 = vxpose.xlu0.b32.cont [9/16] 0.0, 128
        %766 = vxpose.xlu0.b32.cont [10/16] 0.0, 128
        %767 = vxpose.xlu0.b32.cont [11/16] 0.0, 128
        %768 = vxpose.xlu0.b32.cont [12/16] 0.0, 128
        %769 = vxpose.xlu0.b32.cont [13/16] 0.0, 128
        %770 = vxpose.xlu0.b32.cont [14/16] 0.0, 128
        %771 = vxpose.xlu0.b32.cont [15/16] 0.0, 128
        %772 = vxpose.xlu0.b32.end [16/16] 0.0, 128
        %v773 = vpop.trf.xlu0
        %v774 = vpop.trf.xlu0
        %v775 = vpop.trf.xlu0
        %v776 = vpop.trf.xlu0
        %v777 = vpop.trf.xlu0
        %v778 = vpop.trf.xlu0
        %v779 = vpop.trf.xlu0
        %v780 = vpop.trf.xlu0
        %v781 = vpop.trf.xlu0
        %v782 = vpop.trf.xlu0
        %v783 = vpop.trf.xlu0
        %v784 = vpop.trf.xlu0
        %v785 = vpop.trf.xlu0
        %v786 = vpop.trf.xlu0
        %v787 = vpop.trf.xlu0
        %v788 = vpop.trf.xlu0
        %vm789 = vcmask 15360
        %v791 = vsel %vm789, %v773, 0
        %v794 = vsel %vm789, %v774, 0
        %v797 = vsel %vm789, %v775, 0
        %v800 = vsel %vm789, %v776, 0
        %v803 = vsel %vm789, %v777, 0
        %v806 = vsel %vm789, %v778, 0
        %v809 = vsel %vm789, %v779, 0
        %v812 = vsel %vm789, %v780, 0
        %vm814 = vcmask 1041408
        %v816 = vsel %vm814, %v756, 0
        %818 = vmatprep.subr.mxu0 0.0
        %819 = vmatpush1.msra.mxu0 %v816
        %820 = vmatprep.subr.mxu0 0.0
        %821 = vmatpush1.msra.mxu0 0.0
        %822 = vmatprep.subr.mxu0 0.0
        %823 = vmatpush1.msra.mxu0 0.0
        %824 = vmatprep.subr.mxu0 0.0
        %825 = vmatpush1.msra.mxu0 0.0
        %826 = vmatprep.subr.mxu0 0.0
        %827 = vmatpush1.msra.mxu0 0.0
        %828 = vmatprep.subr.mxu0 0.0
        %829 = vmatpush1.msra.mxu0 0.0
        %830 = vmatprep.subr.mxu0 0.0
        %831 = vmatpush1.msra.mxu0 0.0
        %832 = vmatprep.subr.mxu0 0.0
        %833 = vmatpush1.msra.mxu0 0.0
        %834 = vmatprep.subr.mxu0 0.0
        %835 = vmatpush1.msra.mxu0 0.0
        %836 = vmatprep.subr.mxu0 0.0
        %837 = vmatpush1.msra.mxu0 0.0
        %838 = vmatprep.subr.mxu0 0.0
        %839 = vmatpush1.msra.mxu0 0.0
        %840 = vmatprep.subr.mxu0 0.0
        %841 = vmatpush1.msra.mxu0 0.0
        %842 = vmatprep.subr.mxu0 0.0
        %843 = vmatpush1.msra.mxu0 0.0
        %844 = vmatprep.subr.mxu0 0.0
        %845 = vmatpush1.msra.mxu0 0.0
        %846 = vmatprep.subr.mxu0 0.0
        %847 = vmatpush1.msra.mxu0 0.0
        %848 = vmatprep.subr.mxu0 0.0
        %849 = vmatpush1.msra.mxu0 0.0
        %850 = vmatprep.subr.mxu0 0.0
        %851 = vmatpush1.msra.mxu0 0.0
        %852 = vmatprep.subr.mxu0 0.0
        %853 = vmatpush1.msra.mxu0 0.0
        %854 = vmatprep.subr.mxu0 0.0
        %855 = vmatpush1.msra.mxu0 0.0
        %856 = vmatprep.subr.mxu0 0.0
        %857 = vmatpush1.msra.mxu0 0.0
        %858 = vmatprep.subr.mxu0 0.0
        %859 = vmatpush1.msra.mxu0 0.0
        %860 = vmatprep.subr.mxu0 0.0
        %861 = vmatpush1.msra.mxu0 0.0
        %862 = vmatprep.subr.mxu0 0.0
        %863 = vmatpush1.msra.mxu0 0.0
        %864 = vmatprep.subr.mxu0 0.0
        %865 = vmatpush1.msra.mxu0 0.0
        %866 = vmatprep.subr.mxu0 0.0
        %867 = vmatpush1.msra.mxu0 0.0
        %868 = vmatprep.subr.mxu0 0.0
        %869 = vmatpush1.msra.mxu0 0.0
        %870 = vmatprep.subr.mxu0 0.0
        %871 = vmatpush1.msra.mxu0 0.0
        %872 = vmatprep.subr.mxu0 0.0
        %873 = vmatpush1.msra.mxu0 0.0
        %874 = vmatprep.subr.mxu0 0.0
        %875 = vmatpush1.msra.mxu0 0.0
        %876 = vmatprep.subr.mxu0 0.0
        %877 = vmatpush1.msra.mxu0 0.0
        %878 = vmatprep.subr.mxu0 0.0
        %879 = vmatpush1.msra.mxu0 0.0
        %880 = vmatprep.subr.mxu0 0.0
        %881 = vmatpush1.msra.mxu0 0.0
        %882 = vmatprep.mubr.f32.mxu0 0.0
        %883 = vmatmul.mubr.f32.gmra.mrb[0].mxu0 %v791
        %v884 = vpop.f32.mrb[0].mxu0
        %v885 = vadd.f32 0.0, %v884
        %v886 = vpop.f32.mrb[0].mxu0
        %887 = vmatprep.mubr.f32.mxu0 0.0
        %888 = vmatmul.mubr.f32.gmra.mrb[0].mxu0 %v794
        %v889 = vpop.f32.mrb[0].mxu0
        %v890 = vadd.f32 0.0, %v889
        %v891 = vpop.f32.mrb[0].mxu0
        %892 = vmatprep.mubr.f32.mxu0 0.0
        %893 = vmatmul.mubr.f32.gmra.mrb[0].mxu0 %v797
        %v894 = vpop.f32.mrb[0].mxu0
        %v895 = vadd.f32 0.0, %v894
        %v896 = vpop.f32.mrb[0].mxu0
        %897 = vmatprep.mubr.f32.mxu0 0.0
        %898 = vmatmul.mubr.f32.gmra.mrb[0].mxu0 %v800
        %v899 = vpop.f32.mrb[0].mxu0
        %v900 = vadd.f32 0.0, %v899
        %v901 = vpop.f32.mrb[0].mxu0
        %902 = vmatprep.mubr.f32.mxu0 0.0
        %903 = vmatmul.mubr.f32.gmra.mrb[0].mxu0 %v803
        %v904 = vpop.f32.mrb[0].mxu0
        %v905 = vadd.f32 0.0, %v904
        %v906 = vpop.f32.mrb[0].mxu0
        %907 = vmatprep.mubr.f32.mxu0 0.0
        %908 = vmatmul.mubr.f32.gmra.mrb[0].mxu0 %v806
        %v909 = vpop.f32.mrb[0].mxu0
        %v910 = vadd.f32 0.0, %v909
        %v911 = vpop.f32.mrb[0].mxu0
        %912 = vmatprep.mubr.f32.mxu0 0.0
        %913 = vmatmul.mubr.f32.gmra.mrb[0].mxu0 %v809
        %v914 = vpop.f32.mrb[0].mxu0
        %v915 = vadd.f32 0.0, %v914
        %v916 = vpop.f32.mrb[0].mxu0
        %917 = vmatprep.mubr.f32.mxu0 0.0
        %918 = vmatmul.mubr.f32.gmra.mrb[0].mxu0 %v812
        %v919 = vpop.f32.mrb[0].mxu0
        %v920 = vadd.f32 0.0, %v919
        %v921 = vpop.f32.mrb[0].mxu0
        %922 = vdwg.mxu0
        %vm923 = vcmask 523264
        %v924 = vsel %vm923, %v885, -inf
        %925 = vmax.xlane.f32.xlu0 %v924
        %v926 = vpop.xlane.xlu0 %925
        %v927 = vsel %vm923, %v890, -inf
        %928 = vmax.xlane.f32.xlu0 %v927
        %v929 = vpop.xlane.xlu0 %928
        %v930 = vsel %vm923, %v895, -inf
        %931 = vmax.xlane.f32.xlu0 %v930
        %v932 = vpop.xlane.xlu0 %931
        %v933 = vsel %vm923, %v900, -inf
        %934 = vmax.xlane.f32.xlu0 %v933
        %v935 = vpop.xlane.xlu0 %934
        %v936 = vsel %vm923, %v905, -inf
        %937 = vmax.xlane.f32.xlu0 %v936
        %v938 = vpop.xlane.xlu0 %937
        %v939 = vsel %vm923, %v910, -inf
        %940 = vmax.xlane.f32.xlu0 %v939
        %v941 = vpop.xlane.xlu0 %940
        %v942 = vsel %vm923, %v915, -inf
        %943 = vmax.xlane.f32.xlu0 %v942
        %v944 = vpop.xlane.xlu0 %943
        %v945 = vsel %vm923, %v920, -inf
        %946 = vmax.xlane.f32.xlu0 %v945
        %v947 = vpop.xlane.xlu0 %946
        %v948 = vsub.f32 %v885, %v926
        %v949 = vsub.f32 %v890, %v929
        %v950 = vsub.f32 %v895, %v932
        %v951 = vsub.f32 %v900, %v935
        %v952 = vsub.f32 %v905, %v938
        %v953 = vsub.f32 %v910, %v941
        %v954 = vsub.f32 %v915, %v944
        %v955 = vsub.f32 %v920, %v947
        %v956 = vmul.f32 %v948, 1.442695
        %v957 = vpow.pop %v956
        %v958 = vmul.f32 %v949, 1.442695
        %v959 = vpow.pop %v958
        %v960 = vmul.f32 %v950, 1.442695
        %v961 = vpow.pop %v960
        %v962 = vmul.f32 %v951, 1.442695
        %v963 = vpow.pop %v962
        %v964 = vmul.f32 %v952, 1.442695
        %v965 = vpow.pop %v964
        %v966 = vmul.f32 %v953, 1.442695
        %v967 = vpow.pop %v966
        %v968 = vmul.f32 %v954, 1.442695
        %v969 = vpow.pop %v968
        %v970 = vmul.f32 %v955, 1.442695
        %v971 = vpow.pop %v970
        %v972 = vsel %vm923, %v957, 0.0
        %973 = vadd.xlane.f32.xlu0 %v972
        %v974 = vpop.xlane.xlu0 %973
        %v975 = vsel %vm923, %v959, 0.0
        %976 = vadd.xlane.f32.xlu0 %v975
        %v977 = vpop.xlane.xlu0 %976
        %v978 = vsel %vm923, %v961, 0.0
        %979 = vadd.xlane.f32.xlu0 %v978
        %v980 = vpop.xlane.xlu0 %979
        %v981 = vsel %vm923, %v963, 0.0
        %982 = vadd.xlane.f32.xlu0 %v981
        %v983 = vpop.xlane.xlu0 %982
        %v984 = vsel %vm923, %v965, 0.0
        %985 = vadd.xlane.f32.xlu0 %v984
        %v986 = vpop.xlane.xlu0 %985
        %v987 = vsel %vm923, %v967, 0.0
        %988 = vadd.xlane.f32.xlu0 %v987
        %v989 = vpop.xlane.xlu0 %988
        %v990 = vsel %vm923, %v969, 0.0
        %991 = vadd.xlane.f32.xlu0 %v990
        %v992 = vpop.xlane.xlu0 %991
        %v993 = vsel %vm923, %v971, 0.0
        %994 = vadd.xlane.f32.xlu0 %v993
        %v995 = vpop.xlane.xlu0 %994
        %v996 = vrcp.pop %v974
        %v997 = vmul.f32 1.0, %v996
        %v998 = vrcp.pop %v977
        %v999 = vmul.f32 1.0, %v998
        %v1000 = vrcp.pop %v980
        %v1001 = vmul.f32 1.0, %v1000
        %v1002 = vrcp.pop %v983
        %v1003 = vmul.f32 1.0, %v1002
        %v1004 = vrcp.pop %v986
        %v1005 = vmul.f32 1.0, %v1004
        %v1006 = vrcp.pop %v989
        %v1007 = vmul.f32 1.0, %v1006
        %v1008 = vrcp.pop %v992
        %v1009 = vmul.f32 1.0, %v1008
        %v1010 = vrcp.pop %v995
        %v1011 = vmul.f32 1.0, %v1010
        %1012 = vxpose.xlu0.b32.start [1/16] %v997, 128
        %1013 = vxpose.xlu0.b32.cont [2/16] %v999, 128
        %1014 = vxpose.xlu0.b32.cont [3/16] %v1001, 128
        %1015 = vxpose.xlu0.b32.cont [4/16] %v1003, 128
        %1016 = vxpose.xlu0.b32.cont [5/16] %v1005, 128
        %1017 = vxpose.xlu0.b32.cont [6/16] %v1007, 128
        %1018 = vxpose.xlu0.b32.cont [7/16] %v1009, 128
        %1019 = vxpose.xlu0.b32.cont [8/16] %v1011, 128
        %1020 = vxpose.xlu0.b32.cont [9/16] 0.0, 128
        %1021 = vxpose.xlu0.b32.cont [10/16] 0.0, 128
        %1022 = vxpose.xlu0.b32.cont [11/16] 0.0, 128
        %1023 = vxpose.xlu0.b32.cont [12/16] 0.0, 128
        %1024 = vxpose.xlu0.b32.cont [13/16] 0.0, 128
        %1025 = vxpose.xlu0.b32.cont [14/16] 0.0, 128
        %1026 = vxpose.xlu0.b32.cont [15/16] 0.0, 128
        %1027 = vxpose.xlu0.b32.end [16/16] 0.0, 128
        %v1028 = vpop.trf.xlu0
        %v1029 = vpop.trf.xlu0
        %v1030 = vpop.trf.xlu0
        %v1031 = vpop.trf.xlu0
        %v1032 = vpop.trf.xlu0
        %v1033 = vpop.trf.xlu0
        %v1034 = vpop.trf.xlu0
        %v1035 = vpop.trf.xlu0
        %v1036 = vpop.trf.xlu0
        %v1037 = vpop.trf.xlu0
        %v1038 = vpop.trf.xlu0
        %v1039 = vpop.trf.xlu0
        %v1040 = vpop.trf.xlu0
        %v1041 = vpop.trf.xlu0
        %v1042 = vpop.trf.xlu0
        %v1043 = vpop.trf.xlu0
        %v1044 = vlaneseq
        %v1045 = vshrl.u32 %v1044, 7
        %v1046 = vsub.s32 0, %v1045
        %v1047 = vrot.slane %v1028, %v1046
        %v1048 = vmul.f32 %v755, %v1047
        %v1049 = vld [vmem:[#allocation3] sm:$0x3]
        %v1051 = vrot.slane %v1048, 2
        %v1052 = vsel %vm923, %v1051, 0
        %1054 = vmatprep.subr.mxu0 0.0
        %1055 = vmatpush1.msra.mxu0 %v957
        %1056 = vmatprep.subr.mxu0 0.0
        %1057 = vmatpush1.msra.mxu0 %v959
        %1058 = vmatprep.subr.mxu0 0.0
        %1059 = vmatpush1.msra.mxu0 %v961
        %1060 = vmatprep.subr.mxu0 0.0
        %1061 = vmatpush1.msra.mxu0 %v963
        %1062 = vmatprep.subr.mxu0 0.0
        %1063 = vmatpush1.msra.mxu0 %v965
        %1064 = vmatprep.subr.mxu0 0.0
        %1065 = vmatpush1.msra.mxu0 %v967
        %1066 = vmatprep.subr.mxu0 0.0
        %1067 = vmatpush1.msra.mxu0 %v969
        %1068 = vmatprep.subr.mxu0 0.0
        %1069 = vmatpush1.msra.mxu0 %v971
        %1070 = vmatprep.subr.mxu0 0.0
        %1071 = vmatpush1.msra.mxu0 0.0
        %1072 = vmatprep.subr.mxu0 0.0
        %1073 = vmatpush1.msra.mxu0 0.0
        %1074 = vmatprep.subr.mxu0 0.0
        %1075 = vmatpush1.msra.mxu0 0.0
        %1076 = vmatprep.subr.mxu0 0.0
        %1077 = vmatpush1.msra.mxu0 0.0
        %1078 = vmatprep.subr.mxu0 0.0
        %1079 = vmatpush1.msra.mxu0 0.0
        %1080 = vmatprep.subr.mxu0 0.0
        %1081 = vmatpush1.msra.mxu0 0.0
        %1082 = vmatprep.subr.mxu0 0.0
        %1083 = vmatpush1.msra.mxu0 0.0
        %1084 = vmatprep.subr.mxu0 0.0
        %1085 = vmatpush1.msra.mxu0 0.0
        %1086 = vmatprep.subr.mxu0 0.0
        %1087 = vmatpush1.msra.mxu0 0.0
        %1088 = vmatprep.subr.mxu0 0.0
        %1089 = vmatpush1.msra.mxu0 0.0
        %1090 = vmatprep.subr.mxu0 0.0
        %1091 = vmatpush1.msra.mxu0 0.0
        %1092 = vmatprep.subr.mxu0 0.0
        %1093 = vmatpush1.msra.mxu0 0.0
        %1094 = vmatprep.subr.mxu0 0.0
        %1095 = vmatpush1.msra.mxu0 0.0
        %1096 = vmatprep.subr.mxu0 0.0
        %1097 = vmatpush1.msra.mxu0 0.0
        %1098 = vmatprep.subr.mxu0 0.0
        %1099 = vmatpush1.msra.mxu0 0.0
        %1100 = vmatprep.subr.mxu0 0.0
        %1101 = vmatpush1.msra.mxu0 0.0
        %1102 = vmatprep.subr.mxu0 0.0
        %1103 = vmatpush1.msra.mxu0 0.0
        %1104 = vmatprep.subr.mxu0 0.0
        %1105 = vmatpush1.msra.mxu0 0.0
        %1106 = vmatprep.subr.mxu0 0.0
        %1107 = vmatpush1.msra.mxu0 0.0
        %1108 = vmatprep.subr.mxu0 0.0
        %1109 = vmatpush1.msra.mxu0 0.0
        %1110 = vmatprep.subr.mxu0 0.0
        %1111 = vmatpush1.msra.mxu0 0.0
        %1112 = vmatprep.subr.mxu0 0.0
        %1113 = vmatpush1.msra.mxu0 0.0
        %1114 = vmatprep.subr.mxu0 0.0
        %1115 = vmatpush1.msra.mxu0 0.0
        %1116 = vmatprep.subr.mxu0 0.0
        %1117 = vmatpush1.msra.mxu0 0.0
        %1118 = vmatprep.mubr.f32.mxu0 0.0
        %1119 = vmatmul.mubr.f32.gmra.mrb[0].mxu0 %v1052
        %v1120 = vpop.f32.mrb[0].mxu0
        %v1121 = vadd.f32 0.0, %v1120
        %v1122 = vpop.f32.mrb[0].mxu0
        %1123 = vdwg.mxu0
        %v1124 = vadd.f32 %v1049, %v1121
        %vm1125 = vcmask 517120
        %1126 = vst.msk [vmem:[#allocation3] sm:$0x3] %vm1125, %v1124
        // Predicated region
        $region97: #{tpu_custom_call.1} parent=55 // pred_check
          %p1127 = pneg %p501
        $region98: #{tpu_custom_call.1} parent=55 // pred_check_branch
          %1129 = sbr.rel (%p1127) target = $region100
        $region99: #{tpu_custom_call.1} parent=55 // pred_region
          %v1130 = vld [vmem:[#allocation16] sm:$0x3]
          %v1131 = vld [vmem:[#allocation3] sm:$0x3]
          %v1132 = vld [vmem:[#allocation17] sm:$0xff]
          %v1133 = vld [vmem:[#allocation17 + $0x8] sm:$0xff]
          %1135 = vset.pattern.permute.xlu0 0
          %1136 = vperm.xlu0 %1135, %v1132
          %v1137 = vpop.permute.xlu0 %1136
          %1140 = vset.pattern.permute.xlu0 0
          %1141 = vperm.xlu0 %1140, %v1133
          %v1142 = vpop.permute.xlu0 %1141
          %1144 = vxpose.xlu0.b32.start [1/16] %v1130, 128
          %1145 = vxpose.xlu0.b32.cont [2/16] 0.0, 128
          %1146 = vxpose.xlu0.b32.cont [3/16] 0.0, 128
          %1147 = vxpose.xlu0.b32.cont [4/16] 0.0, 128
          %1148 = vxpose.xlu0.b32.cont [5/16] 0.0, 128
          %1149 = vxpose.xlu0.b32.cont [6/16] 0.0, 128
          %1150 = vxpose.xlu0.b32.cont [7/16] 0.0, 128
          %1151 = vxpose.xlu0.b32.cont [8/16] 0.0, 128
          %1152 = vxpose.xlu0.b32.cont [9/16] 0.0, 128
          %1153 = vxpose.xlu0.b32.cont [10/16] 0.0, 128
          %1154 = vxpose.xlu0.b32.cont [11/16] 0.0, 128
          %1155 = vxpose.xlu0.b32.cont [12/16] 0.0, 128
          %1156 = vxpose.xlu0.b32.cont [13/16] 0.0, 128
          %1157 = vxpose.xlu0.b32.cont [14/16] 0.0, 128
          %1158 = vxpose.xlu0.b32.cont [15/16] 0.0, 128
          %1159 = vxpose.xlu0.b32.end [16/16] 0.0, 128
          %v1160 = vpop.trf.xlu0
          %v1161 = vpop.trf.xlu0
          %v1162 = vpop.trf.xlu0
          %v1163 = vpop.trf.xlu0
          %v1164 = vpop.trf.xlu0
          %v1165 = vpop.trf.xlu0
          %v1166 = vpop.trf.xlu0
          %v1167 = vpop.trf.xlu0
          %v1168 = vpop.trf.xlu0
          %v1169 = vpop.trf.xlu0
          %v1170 = vpop.trf.xlu0
          %v1171 = vpop.trf.xlu0
          %v1172 = vpop.trf.xlu0
          %v1173 = vpop.trf.xlu0
          %v1174 = vpop.trf.xlu0
          %v1175 = vpop.trf.xlu0
          %v1177 = vsel %vm789, %v1160, 0
          %v1180 = vsel %vm789, %v1161, 0
          %v1183 = vsel %vm814, %v1131, 0
          %1185 = vmatprep.subr.mxu0 0.0
          %1186 = vmatpush1.msra.mxu0 %v1183
          %1187 = vmatprep.subr.mxu0 0.0
          %1188 = vmatpush1.msra.mxu0 0.0
          %1189 = vmatprep.subr.mxu0 0.0
          %1190 = vmatpush1.msra.mxu0 0.0
          %1191 = vmatprep.subr.mxu0 0.0
          %1192 = vmatpush1.msra.mxu0 0.0
          %1193 = vmatprep.subr.mxu0 0.0
          %1194 = vmatpush1.msra.mxu0 0.0
          %1195 = vmatprep.subr.mxu0 0.0
          %1196 = vmatpush1.msra.mxu0 0.0
          %1197 = vmatprep.subr.mxu0 0.0
          %1198 = vmatpush1.msra.mxu0 0.0
          %1199 = vmatprep.subr.mxu0 0.0
          %1200 = vmatpush1.msra.mxu0 0.0
          %1201 = vmatprep.subr.mxu0 0.0
          %1202 = vmatpush1.msra.mxu0 0.0
          %1203 = vmatprep.subr.mxu0 0.0
          %1204 = vmatpush1.msra.mxu0 0.0
          %1205 = vmatprep.subr.mxu0 0.0
          %1206 = vmatpush1.msra.mxu0 0.0
          %1207 = vmatprep.subr.mxu0 0.0
          %1208 = vmatpush1.msra.mxu0 0.0
          %1209 = vmatprep.subr.mxu0 0.0
          %1210 = vmatpush1.msra.mxu0 0.0
          %1211 = vmatprep.subr.mxu0 0.0
          %1212 = vmatpush1.msra.mxu0 0.0
          %1213 = vmatprep.subr.mxu0 0.0
          %1214 = vmatpush1.msra.mxu0 0.0
          %1215 = vmatprep.subr.mxu0 0.0
          %1216 = vmatpush1.msra.mxu0 0.0
          %1217 = vmatprep.subr.mxu0 0.0
          %1218 = vmatpush1.msra.mxu0 0.0
          %1219 = vmatprep.subr.mxu0 0.0
          %1220 = vmatpush1.msra.mxu0 0.0
          %1221 = vmatprep.subr.mxu0 0.0
          %1222 = vmatpush1.msra.mxu0 0.0
          %1223 = vmatprep.subr.mxu0 0.0
          %1224 = vmatpush1.msra.mxu0 0.0
          %1225 = vmatprep.subr.mxu0 0.0
          %1226 = vmatpush1.msra.mxu0 0.0
          %1227 = vmatprep.subr.mxu0 0.0
          %1228 = vmatpush1.msra.mxu0 0.0
          %1229 = vmatprep.subr.mxu0 0.0
          %1230 = vmatpush1.msra.mxu0 0.0
          %1231 = vmatprep.subr.mxu0 0.0
          %1232 = vmatpush1.msra.mxu0 0.0
          %1233 = vmatprep.subr.mxu0 0.0
          %1234 = vmatpush1.msra.mxu0 0.0
          %1235 = vmatprep.subr.mxu0 0.0
          %1236 = vmatpush1.msra.mxu0 0.0
          %1237 = vmatprep.subr.mxu0 0.0
          %1238 = vmatpush1.msra.mxu0 0.0
          %1239 = vmatprep.subr.mxu0 0.0
          %1240 = vmatpush1.msra.mxu0 0.0
          %1241 = vmatprep.subr.mxu0 0.0
          %1242 = vmatpush1.msra.mxu0 0.0
          %1243 = vmatprep.subr.mxu0 0.0
          %1244 = vmatpush1.msra.mxu0 0.0
          %1245 = vmatprep.subr.mxu0 0.0
          %1246 = vmatpush1.msra.mxu0 0.0
          %1247 = vmatprep.subr.mxu0 0.0
          %1248 = vmatpush1.msra.mxu0 0.0
          %1249 = vmatprep.mubr.f32.mxu0 0.0
          %1250 = vmatmul.mubr.f32.gmra.mrb[0].mxu0 %v1177
          %v1251 = vpop.f32.mrb[0].mxu0
          %v1252 = vadd.f32 %v1137, %v1251
          %v1253 = vpop.f32.mrb[0].mxu0
          %1254 = vmatprep.mubr.f32.mxu0 0.0
          %1255 = vmatmul.mubr.f32.gmra.mrb[0].mxu0 %v1180
          %v1256 = vpop.f32.mrb[0].mxu0
          %v1257 = vadd.f32 %v1142, %v1256
          %v1258 = vpop.f32.mrb[0].mxu0
          %1259 = vdwg.mxu0
          %v1260 = vstv %s500
          %v1261 = vmul.f32 %v1260, %v1252
          %v1262 = vmul.f32 %v1260, %v1257
          %1263 = vst.msk [vmem:[%s498] sm:$0xff] %vm923, %v1261
          %1264 = vst.msk [vmem:[%s498 + $0x8] sm:$0xff] %vm923, %v1262
        $region100: #{tpu_custom_call.1} parent=55 // pred_fallthru
          _
        %s1265 = sand.u32 %s254, 1
        %s1266 = scalar_lea.sflag [#allocation6], %s1265
        %s1267 = sand.u32 %s254, 1
        %s1268 = smul.addr %s1267, 16
        %s1269 = scalar_lea.vmem [#allocation20], %s1268
        // Predicated region
        $region101: #{tpu_custom_call.1} parent=55 // pred_check
          %p1270 = pneg %p264
        $region102: #{tpu_custom_call.1} parent=55 // pred_check_branch
          %1272 = sbr.rel (%p1270) target = $region104
        $region103: #{tpu_custom_call.1} parent=55 // pred_region
          %s1274 = ssub.s32 256, 256
          %1275 = vsyncadd %s1266, %s1274
          %s1276 = smul.addr %s37, 2
          %s1277 = smul.addr %s1276, 128
          %s1278 = scalar_lea.hbm %s9, %s1277
          %s1279 = sshll.u32 %s1269, 4
          %s1280 = int_to_ptr.vmem [resolvable:$true] %s1279
          %1285 = dma.vmem_to_hbm [thread:$0]  %s1280, 256, %s1278, %s1266, 128, 128, 8
        $region104: #{tpu_custom_call.1} parent=55 // pred_fallthru
          _
      $region56: #{tpu_custom_call.1} parent=5 // pred_fallthru
        _
      %p1286 = scmp.le.s32.totalorder 2, %s28
      // Predicated region
      $region105: #{tpu_custom_call.1} parent=5 // pred_check
        %p1287 = pneg %p1286
      $region106: #{tpu_custom_call.1} parent=5 // pred_check_branch
        %1289 = sbr.rel (%p1287) target = $region108
      $region107: #{tpu_custom_call.1} parent=5 // pred_region
        %s1290 = ssub.s32 %s28, 2
        // Predicated region
        $region109: #{tpu_custom_call.1} parent=107 // pred_check
          %p1291 = pneg %p270
        $region110: #{tpu_custom_call.1} parent=107 // pred_check_branch
          %1293 = sbr.rel (%p1291) target = $region112
        $region111: #{tpu_custom_call.1} parent=107 // pred_region
          %s1294 = sand.u32 %s255, 1
          %s1295 = scalar_lea.sflag [#allocation6], %s1294
          %s1296 = sand.u32 %s255, 1
          %s1297 = smul.addr %s1296, 16
          %s1298 = scalar_lea.vmem [#allocation20], %s1297
          %1299 = dma.done %s1295, 256
        $region112: #{tpu_custom_call.1} parent=107 // pred_fallthru
          _
      $region108: #{tpu_custom_call.1} parent=5 // pred_fallthru
        _
    $region6: #{tpu_custom_call.1} parent=1 // loop_footer
      %s32 = sadd.s32 1, %s28
    $region7: #{tpu_custom_call.1} parent=1 // loop_footer_branch
      %27 = sbr.rel target = $region3
    $region8: #{tpu_custom_call.1} parent=1 // loop_exit
      _
    %1300 = vsyncpa [#allocation5], 1
    %s1301 = scalar_lea.sflag [#allocation5], 1
    %1302 = vsyncpa %s1301, 1
    %1303 = vsyncpa [#allocation9], 1
    %s1304 = scalar_lea.sflag [#allocation9], 1
    %1305 = vsyncpa %s1304, 1
    %1306 = vsyncpa [#allocation12], 1
    %1307 = vsyncpa [#allocation15], 1
    %1308 = vsyncpa [#allocation18], 1
    %1309 = vsyncpa [#allocation6], 1
    %s1310 = scalar_lea.sflag [#allocation6], 1
    %1311 = vsyncpa %s1310, 1
    %1312 = vsyncpa [#allocation7], 1
    %s1313 = scalar_lea.sflag [#allocation7], 1
    %1314 = vsyncpa %s1313, 1

</llo_original>
